<compile_context>
chip_gen: v7x
topology: tpu7x:2x2x1
jax: 0.10.0
libtpu: 0.0.40
codegen_flags: <defaults>
</compile_context>

<pallas_src>
import functools
import math

import numpy as np

import jax
import jax.numpy as jnp
from jax.experimental import pallas as pl
from jax.experimental.pallas import tpu as pltpu

KSIZE, STRIDE, PAD = 4, 2, 1  # every ConvTranspose2d in this module


# ----------------------------------------------------------------------------
# Fused Pallas kernel for the whole decoder (one batch tile per grid step):
#     out = tanh( relu(x @ M1 + b1) @ M2 + b2 )
# M1/M2 arrive as bf16 (halved HBM bytes), dots accumulate in f32 on the MXU,
# epilogues run in f32.  The intermediate `h` never leaves VMEM / vregs.
# ----------------------------------------------------------------------------
def _decoder_kernel(x_ref, m1_ref, b1_ref, m2_ref, b2_ref, o_ref):
    x = x_ref[...].astype(jnp.bfloat16)                              # (tb, Cin*H*W)
    h = jnp.dot(x, m1_ref[...], preferred_element_type=jnp.float32)  # bf16 MXU, f32 acc
    h = jnp.maximum(h + b1_ref[...], 0.0)                            # bias + ReLU (f32)
    y = jnp.dot(h.astype(jnp.bfloat16), m2_ref[...],
                preferred_element_type=jnp.float32)
    o_ref[...] = jnp.tanh(y + b2_ref[...])                           # bias + Tanh (f32)


def decoder_forward(x, m1, b1, m2, b2, *, out_chw, tile_b=256):
    """Decoder forward. `x` is the flat latent (B, c*h*w); the module's View is
    implicit because M1's rows are in NCHW-flat order. Returns NCHW (B,C,H,W)."""
    x2d = x.reshape(x.shape[0], -1).astype(jnp.float32)
    batch, k1 = x2d.shape
    n1 = m1.shape[1]
    n2 = m2.shape[1]

    # Batch tile: multiple of 8 sublanes, capped (VMEM-safe on v7x too).
    tb = min(tile_b, ((batch + 7) // 8) * 8)
    n_tiles = pl.cdiv(batch, tb)
    batch_pad = n_tiles * tb
    if batch_pad != batch:
        x2d = jnp.pad(x2d, ((0, batch_pad - batch), (0, 0)))

    grid_spec = pltpu.PrefetchScalarGridSpec(
        num_scalar_prefetch=0,
        grid=(n_tiles,),
        in_specs=[
            pl.BlockSpec((tb, k1), lambda i: (i, 0)),   # x tile (pipelined)
            pl.BlockSpec((k1, n1), lambda i: (0, 0)),   # M1 resident across grid
            pl.BlockSpec((1, n1), lambda i: (0, 0)),    # b1 resident
            pl.BlockSpec((n1, n2), lambda i: (0, 0)),   # M2 resident
            pl.BlockSpec((1, n2), lambda i: (0, 0)),    # b2 resident
        ],
        out_specs=pl.BlockSpec((tb, n2), lambda i: (i, 0)),
    )
    out_flat = pl.pallas_call(
        _decoder_kernel,
        out_shape=jax.ShapeDtypeStruct((batch_pad, n2), jnp.float32),
        grid_spec=grid_spec,
        compiler_params=pltpu.CompilerParams(dimension_semantics=("parallel",)),
    )(x2d, m1, b1, m2, b2)
    # Columns are already (c_out, oh, ow) NCHW-flat -> pure reshape, no transpose.
    return out_flat[:batch].reshape((batch,) + out_chw)


# ----------------------------------------------------------------------------
# One-time (parameter-load-time) folding of ConvTranspose2d into an exact
# dense NCHW-flat matrix.  Runs on host with concrete params, outside jit.
# ----------------------------------------------------------------------------
def convtranspose_as_matrix(w, h_in, w_in, stride=STRIDE, pad=PAD):
    """w: (Cin, Cout, K, K) PyTorch ConvTranspose2d weight.
    Returns M (Cin*h_in*w_in, Cout*h_out*w_out), NCHW-flat rows/cols, such
    that y_flat = x_flat @ M equals ConvTranspose2d(x) (without bias)."""
    w = np.asarray(w, dtype=np.float32)
    cin, cout, k, _ = w.shape
    h_out = (h_in - 1) * stride - 2 * pad + k
    w_out = (w_in - 1) * stride - 2 * pad + k
    m = np.zeros((cin * h_in * w_in, cout * h_out * w_out), np.float32)
    ci = np.arange(cin)
    co = np.arange(cout)
    for i in range(h_in):
        for j in range(w_in):
            for kh in range(k):
                oh = stride * i + kh - pad
                if not 0 <= oh < h_out:
                    continue
                for kw in range(k):
                    ow = stride * j + kw - pad
                    if not 0 <= ow < w_out:
                        continue
                    rows = ci * (h_in * w_in) + i * w_in + j
                    cols = co * (h_out * w_out) + oh * w_out + ow
                    m[np.ix_(rows, cols)] += w[:, :, kh, kw]
    return m, (h_out, w_out)


def prepare_decoder_params(params, h_lat, w_lat):
    """Fold both ConvTranspose2d layers into dense matrices (bf16 for halved
    weight DMA) + lane-dense f32 bias rows."""
    m1_np, (h_mid, w_mid) = convtranspose_as_matrix(params["w1"], h_lat, w_lat)
    m2_np, (h_out, w_out) = convtranspose_as_matrix(params["w2"], h_mid, w_mid)
    cout2 = int(params["w2"].shape[1])
    m1 = jnp.asarray(m1_np, dtype=jnp.bfloat16)
    m2 = jnp.asarray(m2_np, dtype=jnp.bfloat16)
    # bias[c] broadcast over (oh, ow) in (c, oh, ow) column order -> repeat.
    b1 = jnp.asarray(np.repeat(np.asarray(params["b1"], np.float32), h_mid * w_mid)[None, :])
    b2 = jnp.asarray(np.repeat(np.asarray(params["b2"], np.float32), h_out * w_out)[None, :])
    return m1, b1, m2, b2, (cout2, h_out, w_out)


# ----------------------------------------------------------------------------
# Pure-JAX reference (XLA transposed conv, f32) for correctness check.
# ----------------------------------------------------------------------------
def conv_transpose2d_ref(x, wt, bias, activation):
    cout = wt.shape[1]
    w_conv = jnp.flip(wt, axis=(2, 3)).transpose(1, 0, 2, 3)  # (Cout, Cin, K, K)
    out = jax.lax.conv_general_dilated(
        x, w_conv, window_strides=(1, 1),
        padding=[(KSIZE - 1 - PAD,) * 2, (KSIZE - 1 - PAD,) * 2],
        lhs_dilation=(STRIDE, STRIDE),
        dimension_numbers=("NCHW", "OIHW", "NCHW"))
    out = out + bias.reshape(1, cout, 1, 1)
    if activation == "relu":
        out = jnp.maximum(out, 0.0)
    elif activation == "tanh":
        out = jnp.tanh(out)
    return out


def decoder_forward_ref(x_flat, params, c_latent, h_latent, w_latent):
    x = x_flat.reshape(-1, c_latent, h_latent, w_latent)
    h = conv_transpose2d_ref(x, params["w1"], params["b1"], "relu")
    y = conv_transpose2d_ref(h, params["w2"], params["b2"], "tanh")
    return y


if __name__ == "__main__":
    # Module hyperparameters
    B = 2
    data_shape = (B, 3, 16, 16)    # (N, C, H, W)
    dim_h = 8
    min_dim = 4
    n_conv = int(math.log(data_shape[2] / min_dim, 2))           # = 2
    c_latent = 2 * (n_conv - 1) * dim_h                          # = 16
    h_latent = data_shape[2] // (2 ** n_conv)                    # = 4
    w_latent = data_shape[3] // (2 ** n_conv)                    # = 4

    # n_maps(c): chan if c == 0 else dim_h * 2**(c-1) (consistent with the View)
    def n_maps(c, dh, chan):
        return chan if c == 0 else dh * (2 ** (c - 1))

    cin1, cout1 = n_maps(2, dim_h, data_shape[1]), n_maps(1, dim_h, data_shape[1])  # 16 -> 8
    cin2, cout2 = n_maps(1, dim_h, data_shape[1]), n_maps(0, dim_h, data_shape[1])  # 8 -> 3

    # Deterministic synthetic parameters (PyTorch ConvTranspose2d layout).
    key = jax.random.PRNGKey(0)
    k1, k2, k3, k4, k5 = jax.random.split(key, 5)
    bnd1 = 1.0 / math.sqrt(cin1 * KSIZE * KSIZE)
    bnd2 = 1.0 / math.sqrt(cin2 * KSIZE * KSIZE)
    params = {
        "w1": jax.random.uniform(k1, (cin1, cout1, KSIZE, KSIZE), jnp.float32, -bnd1, bnd1),
        "b1": jax.random.uniform(k2, (cout1,), jnp.float32, -bnd1, bnd1),
        "w2": jax.random.uniform(k3, (cin2, cout2, KSIZE, KSIZE), jnp.float32, -bnd2, bnd2),
        "b2": jax.random.uniform(k4, (cout2,), jnp.float32, -bnd2, bnd2),
    }

    # Flat latent; View(-1, 16, 4, 4) happens implicitly inside the fused kernel.
    x_flat = jax.random.normal(k5, (B, c_latent * h_latent * w_latent), jnp.float32)

    # One-time weight transform at parameter-load time (outside the jitted forward).
    m1, b1, m2, b2, out_chw = prepare_decoder_params(params, h_latent, w_latent)

    fwd = jax.jit(functools.partial(decoder_forward, out_chw=out_chw))
    out = jax.block_until_ready(fwd(x_flat, m1, b1, m2, b2))
    assert out.shape == data_shape, out.shape

    # Reference is pure f32; kernel uses bf16 weights/activations with f32
    # accumulation -> relaxed tolerance.
    ref = decoder_forward_ref(x_flat, params, c_latent, h_latent, w_latent)
    max_err = float(jnp.max(jnp.abs(out - ref)))
    assert jnp.allclose(out, ref, atol=3e-2, rtol=3e-2), max_err

    print("KERNEL_OK")
</pallas_src>

<mosaic_0001>
module attributes {stable_mosaic.version = 11 : i64} {
  func.func @_decoder_kernel(%arg0: i32, %arg1: memref<8x256xf32, #tpu.memory_space<vmem>>, %arg2: memref<256x512xbf16, #tpu.memory_space<vmem>>, %arg3: memref<1x512xf32, #tpu.memory_space<vmem>>, %arg4: memref<512x768xbf16, #tpu.memory_space<vmem>>, %arg5: memref<1x768xf32, #tpu.memory_space<vmem>>, %arg6: memref<8x768xf32, #tpu.memory_space<vmem>>) attributes {dimension_semantics = [#tpu.dimension_semantics<parallel>], iteration_bounds = array<i64: 1>, scalar_prefetch = 0 : i64, scratch_operands = 0 : i64, tpu.core_type = #tpu.core_type<tc>, window_params = [{transform_indices = @transform_0, window_bounds = array<i64: 8, 256>}, {pipeline_mode = #tpu.pipeline_mode<synchronous>, transform_indices = @transform_1, window_bounds = array<i64: 256, 512>}, {pipeline_mode = #tpu.pipeline_mode<synchronous>, transform_indices = @transform_2, window_bounds = array<i64: 1, 512>}, {pipeline_mode = #tpu.pipeline_mode<synchronous>, transform_indices = @transform_3, window_bounds = array<i64: 512, 768>}, {pipeline_mode = #tpu.pipeline_mode<synchronous>, transform_indices = @transform_4, window_bounds = array<i64: 1, 768>}, {transform_indices = @transform_5, window_bounds = array<i64: 8, 768>}]} {
    %c0 = arith.constant 0 : index
    %c0_0 = arith.constant 0 : index
    %0 = vector.load %arg1[%c0, %c0_0] : memref<8x256xf32, #tpu.memory_space<vmem>>, vector<8x256xf32>
    %1 = arith.truncf %0 : vector<8x256xf32> to vector<8x256xbf16>
    %c0_1 = arith.constant 0 : index
    %c0_2 = arith.constant 0 : index
    %2 = vector.load %arg2[%c0_1, %c0_2] : memref<256x512xbf16, #tpu.memory_space<vmem>>, vector<256x512xbf16>
    %cst = arith.constant dense<0.000000e+00> : vector<8x512xf32>
    %3 = tpu.matmul %1, %2, %cst {dimension_numbers = #tpu.dot_dimension_numbers<[1], [0], [0], [1], [0, 0, 1, 1], [], []>} : vector<8x256xbf16>, vector<256x512xbf16>, vector<8x512xf32> -> vector<8x512xf32>
    %c0_3 = arith.constant 0 : index
    %c0_4 = arith.constant 0 : index
    %4 = vector.load %arg3[%c0_3, %c0_4] : memref<1x512xf32, #tpu.memory_space<vmem>>, vector<1x512xf32>
    %5 = vector.broadcast %4 : vector<1x512xf32> to vector<8x512xf32>
    %6 = arith.addf %3, %5 : vector<8x512xf32>
    %cst_5 = arith.constant 0.000000e+00 : f32
    %7 = vector.broadcast %cst_5 : f32 to vector<8x512xf32>
    %8 = arith.maximumf %6, %7 : vector<8x512xf32>
    %9 = arith.truncf %8 : vector<8x512xf32> to vector<8x512xbf16>
    %c0_6 = arith.constant 0 : index
    %c0_7 = arith.constant 0 : index
    %10 = vector.load %arg4[%c0_6, %c0_7] : memref<512x768xbf16, #tpu.memory_space<vmem>>, vector<512x768xbf16>
    %cst_8 = arith.constant dense<0.000000e+00> : vector<8x768xf32>
    %11 = tpu.matmul %9, %10, %cst_8 {dimension_numbers = #tpu.dot_dimension_numbers<[1], [0], [0], [1], [0, 0, 1, 1], [], []>} : vector<8x512xbf16>, vector<512x768xbf16>, vector<8x768xf32> -> vector<8x768xf32>
    %c0_9 = arith.constant 0 : index
    %c0_10 = arith.constant 0 : index
    %12 = vector.load %arg5[%c0_9, %c0_10] : memref<1x768xf32, #tpu.memory_space<vmem>>, vector<1x768xf32>
    %13 = vector.broadcast %12 : vector<1x768xf32> to vector<8x768xf32>
    %14 = arith.addf %11, %13 : vector<8x768xf32>
    %15 = math.tanh %14 : vector<8x768xf32>
    %c0_11 = arith.constant 0 : index
    %c0_12 = arith.constant 0 : index
    %16 = vector.load %arg6[%c0_11, %c0_12] : memref<8x768xf32, #tpu.memory_space<vmem>>, vector<8x768xf32>
    tpu.vector_store %arg6[%c0_11, %c0_12], %15 {strides = array<i32>} : memref<8x768xf32, #tpu.memory_space<vmem>>, vector<8x768xf32>,
    return
  }
  func.func @transform_0(%arg0: i32) -> (i32, i32) {
    %c0_i32 = arith.constant 0 : i32
    %c0_i32_0 = arith.constant 0 : i32
    return %arg0, %c0_i32 : i32, i32
  }
  func.func @transform_1(%arg0: i32) -> (i32, i32) {
    %c0_i32 = arith.constant 0 : i32
    %c0_i32_0 = arith.constant 0 : i32
    %c0_i32_1 = arith.constant 0 : i32
    return %c0_i32, %c0_i32_0 : i32, i32
  }
  func.func @transform_2(%arg0: i32) -> (i32, i32) {
    %c0_i32 = arith.constant 0 : i32
    %c0_i32_0 = arith.constant 0 : i32
    %c0_i32_1 = arith.constant 0 : i32
    return %c0_i32, %c0_i32_0 : i32, i32
  }
  func.func @transform_3(%arg0: i32) -> (i32, i32) {
    %c0_i32 = arith.constant 0 : i32
    %c0_i32_0 = arith.constant 0 : i32
    %c0_i32_1 = arith.constant 0 : i32
    return %c0_i32, %c0_i32_0 : i32, i32
  }
  func.func @transform_4(%arg0: i32) -> (i32, i32) {
    %c0_i32 = arith.constant 0 : i32
    %c0_i32_0 = arith.constant 0 : i32
    %c0_i32_1 = arith.constant 0 : i32
    return %c0_i32, %c0_i32_0 : i32, i32
  }
  func.func @transform_5(%arg0: i32) -> (i32, i32) {
    %c0_i32 = arith.constant 0 : i32
    %c0_i32_0 = arith.constant 0 : i32
    return %arg0, %c0_i32 : i32, i32
  }
}

</mosaic_0001>

<llo_original>
// kernel: decoder_forward.1
$region0: #{decoder_forward.1}
  #allocation0 [shape = 'u32[]', space=smem, size = 0x4, offset = 0x4, fixed_abs, tag = 'smem constant byte address 0x4 - core index']
  #allocation1 [shape = 'u32[144,128]{1,0:T(1,128)}', space=vmem, size = 0x12000, scoped, tag = 'internal scratch']
  %s0 = inlined_call_operand.vmem [shape: f32[8,256], index: 0, kind: input, shape index: {}]
  %s1 = inlined_call_operand.hbm [shape: bf16[256,512], index: 1, kind: input, shape index: {}]
  %s2 = inlined_call_operand.vmem [shape: f32[1,512], index: 2, kind: input, shape index: {}]
  %s3 = inlined_call_operand.hbm [shape: bf16[512,768], index: 3, kind: input, shape index: {}]
  %s4 = inlined_call_operand.vmem [shape: f32[1,768], index: 4, kind: input, shape index: {}]
  %s5 = inlined_call_operand.vmem [shape: f32[8,768], index: 5, kind: output, shape index: {}]
  %s6 = sld [smem:[#allocation0]]
  $region38: #{decoder_forward.1} parent=0
    _
  %s8 = ssub.s32 1, %s6
  %s9 = scalar_select 0, %s8, %s6
  $region1: #{decoder_forward.1} parent=0
    #allocation2 [shape = 'u8[262144]{0}', space=vmem, size = 0x40000, scoped, tag = 'input window, operand 1, single buffered']
    #allocation3 [shape = 's32[1]{0}', space=sflag, size = 0x4, scoped, tag = 'scoped memory for decoder_forward.1']
    #allocation4 [shape = 'u8[786432]{0}', space=vmem, size = 0xc0000, scoped, tag = 'input window, operand 3, single buffered']
    #allocation5 [shape = 's32[1]{0}', space=sflag, size = 0x4, scoped, tag = 'scoped memory for decoder_forward.1']
    %10 = vsyncpa [#allocation3], 0
    %11 = vsyncpa [#allocation5], 0
    // Predicated region
    $region2: #{decoder_forward.1} parent=1 // pred_check
      _
    $region3: #{decoder_forward.1} parent=1 // pred_check_branch
      %13 = sbr.rel (0) target = $region5
    $region4: #{decoder_forward.1} parent=1 // pred_region
      _
    $region5: #{decoder_forward.1} parent=1 // pred_fallthru
      _
    // Predicated region
    $region6: #{decoder_forward.1} parent=1 // pred_check
      _
    $region7: #{decoder_forward.1} parent=1 // pred_check_branch
      %15 = sbr.rel (0) target = $region9
    $region8: #{decoder_forward.1} parent=1 // pred_region
      %s17 = ssub.s32 8192, 8192
      %18 = vsyncadd [#allocation3], %s17
      %s19 = sshll.u32 [#allocation2], 4
      %s20 = int_to_ptr.vmem [resolvable:$true] %s19
      %25 = dma.hbm_to_vmem [thread:$0]  %s1, 8192, %s20, [#allocation3], 256, 256, 16
    $region9: #{decoder_forward.1} parent=1 // pred_fallthru
      _
    // Predicated region
    $region10: #{decoder_forward.1} parent=1 // pred_check
      _
    $region11: #{decoder_forward.1} parent=1 // pred_check_branch
      %27 = sbr.rel (0) target = $region13
    $region12: #{decoder_forward.1} parent=1 // pred_region
      _
    $region13: #{decoder_forward.1} parent=1 // pred_fallthru
      _
    // Predicated region
    $region14: #{decoder_forward.1} parent=1 // pred_check
      _
    $region15: #{decoder_forward.1} parent=1 // pred_check_branch
      %29 = sbr.rel (0) target = $region17
    $region16: #{decoder_forward.1} parent=1 // pred_region
      %s31 = ssub.s32 24576, 24576
      %32 = vsyncadd [#allocation5], %s31
      %s33 = sshll.u32 [#allocation4], 4
      %s34 = int_to_ptr.vmem [resolvable:$true] %s33
      %39 = dma.hbm_to_vmem [thread:$0]  %s3, 24576, %s34, [#allocation5], 384, 384, 24
    $region17: #{decoder_forward.1} parent=1 // pred_fallthru
      _
    // Predicated region
    $region18: #{decoder_forward.1} parent=1 // pred_check
      _
    $region19: #{decoder_forward.1} parent=1 // pred_check_branch
      %41 = sbr.rel (0) target = $region21
    $region20: #{decoder_forward.1} parent=1 // pred_region
      _
    $region21: #{decoder_forward.1} parent=1 // pred_fallthru
      _
    // Predicated region
    $region22: #{decoder_forward.1} parent=1 // pred_check
      _
    $region23: #{decoder_forward.1} parent=1 // pred_check_branch
      %43 = sbr.rel (0) target = $region25
    $region24: #{decoder_forward.1} parent=1 // pred_region
      %44 = dma.done [#allocation3], 8192
    $region25: #{decoder_forward.1} parent=1 // pred_fallthru
      _
    // Predicated region
    $region26: #{decoder_forward.1} parent=1 // pred_check
      _
    $region27: #{decoder_forward.1} parent=1 // pred_check_branch
      %46 = sbr.rel (0) target = $region29
    $region28: #{decoder_forward.1} parent=1 // pred_region
      %47 = dma.done [#allocation5], 24576
    $region29: #{decoder_forward.1} parent=1 // pred_fallthru
      _
    %v48 = vld [vmem:[%s0] sm:$0xff]
    %v49 = vld [vmem:[%s0 + $0x8] sm:$0xff]
    %v50 = vpack.c.bf16 %v48, %v48
    %v51 = vpack.c.bf16 %v49, %v49
    %v52 = vld [vmem:[#allocation2] sm:$0xff]
    %v53 = vld [vmem:[#allocation2 + $0x8] sm:$0xff]
    %v54 = vld [vmem:[#allocation2 + $0x10] sm:$0xff]
    %v55 = vld [vmem:[#allocation2 + $0x18] sm:$0xff]
    %v56 = vld [vmem:[#allocation2 + $0x20] sm:$0xff]
    %v57 = vld [vmem:[#allocation2 + $0x28] sm:$0xff]
    %v58 = vld [vmem:[#allocation2 + $0x30] sm:$0xff]
    %v59 = vld [vmem:[#allocation2 + $0x38] sm:$0xff]
    %v60 = vld [vmem:[#allocation2 + $0x40] sm:$0xff]
    %v61 = vld [vmem:[#allocation2 + $0x48] sm:$0xff]
    %v62 = vld [vmem:[#allocation2 + $0x50] sm:$0xff]
    %v63 = vld [vmem:[#allocation2 + $0x58] sm:$0xff]
    %v64 = vld [vmem:[#allocation2 + $0x60] sm:$0xff]
    %v65 = vld [vmem:[#allocation2 + $0x68] sm:$0xff]
    %v66 = vld [vmem:[#allocation2 + $0x70] sm:$0xff]
    %v67 = vld [vmem:[#allocation2 + $0x78] sm:$0xff]
    %v68 = vld [vmem:[#allocation2 + $0x80] sm:$0xff]
    %v69 = vld [vmem:[#allocation2 + $0x88] sm:$0xff]
    %v70 = vld [vmem:[#allocation2 + $0x90] sm:$0xff]
    %v71 = vld [vmem:[#allocation2 + $0x98] sm:$0xff]
    %v72 = vld [vmem:[#allocation2 + $0xa0] sm:$0xff]
    %v73 = vld [vmem:[#allocation2 + $0xa8] sm:$0xff]
    %v74 = vld [vmem:[#allocation2 + $0xb0] sm:$0xff]
    %v75 = vld [vmem:[#allocation2 + $0xb8] sm:$0xff]
    %v76 = vld [vmem:[#allocation2 + $0xc0] sm:$0xff]
    %v77 = vld [vmem:[#allocation2 + $0xc8] sm:$0xff]
    %v78 = vld [vmem:[#allocation2 + $0xd0] sm:$0xff]
    %v79 = vld [vmem:[#allocation2 + $0xd8] sm:$0xff]
    %v80 = vld [vmem:[#allocation2 + $0xe0] sm:$0xff]
    %v81 = vld [vmem:[#allocation2 + $0xe8] sm:$0xff]
    %v82 = vld [vmem:[#allocation2 + $0xf0] sm:$0xff]
    %v83 = vld [vmem:[#allocation2 + $0xf8] sm:$0xff]
    %v84 = vld [vmem:[#allocation2 + $0x100] sm:$0xff]
    %v85 = vld [vmem:[#allocation2 + $0x108] sm:$0xff]
    %v86 = vld [vmem:[#allocation2 + $0x110] sm:$0xff]
    %v87 = vld [vmem:[#allocation2 + $0x118] sm:$0xff]
    %v88 = vld [vmem:[#allocation2 + $0x120] sm:$0xff]
    %v89 = vld [vmem:[#allocation2 + $0x128] sm:$0xff]
    %v90 = vld [vmem:[#allocation2 + $0x130] sm:$0xff]
    %v91 = vld [vmem:[#allocation2 + $0x138] sm:$0xff]
    %v92 = vld [vmem:[#allocation2 + $0x140] sm:$0xff]
    %v93 = vld [vmem:[#allocation2 + $0x148] sm:$0xff]
    %v94 = vld [vmem:[#allocation2 + $0x150] sm:$0xff]
    %v95 = vld [vmem:[#allocation2 + $0x158] sm:$0xff]
    %v96 = vld [vmem:[#allocation2 + $0x160] sm:$0xff]
    %v97 = vld [vmem:[#allocation2 + $0x168] sm:$0xff]
    %v98 = vld [vmem:[#allocation2 + $0x170] sm:$0xff]
    %v99 = vld [vmem:[#allocation2 + $0x178] sm:$0xff]
    %v100 = vld [vmem:[#allocation2 + $0x180] sm:$0xff]
    %v101 = vld [vmem:[#allocation2 + $0x188] sm:$0xff]
    %v102 = vld [vmem:[#allocation2 + $0x190] sm:$0xff]
    %v103 = vld [vmem:[#allocation2 + $0x198] sm:$0xff]
    %v104 = vld [vmem:[#allocation2 + $0x1a0] sm:$0xff]
    %v105 = vld [vmem:[#allocation2 + $0x1a8] sm:$0xff]
    %v106 = vld [vmem:[#allocation2 + $0x1b0] sm:$0xff]
    %v107 = vld [vmem:[#allocation2 + $0x1b8] sm:$0xff]
    %v108 = vld [vmem:[#allocation2 + $0x1c0] sm:$0xff]
    %v109 = vld [vmem:[#allocation2 + $0x1c8] sm:$0xff]
    %v110 = vld [vmem:[#allocation2 + $0x1d0] sm:$0xff]
    %v111 = vld [vmem:[#allocation2 + $0x1d8] sm:$0xff]
    %v112 = vld [vmem:[#allocation2 + $0x1e0] sm:$0xff]
    %v113 = vld [vmem:[#allocation2 + $0x1e8] sm:$0xff]
    %v114 = vld [vmem:[#allocation2 + $0x1f0] sm:$0xff]
    %v115 = vld [vmem:[#allocation2 + $0x1f8] sm:$0xff]
    %v116 = vld [vmem:[%s2] sm:$0xf]
    %v118 = vlaneseq
    %v119 = vshrl.u32 %v118, 7
    %v120 = vsub.s32 0, %v119
    %v121 = vrot.slane %v116, %v120
    %v122 = vlaneseq
    %v123 = vshrl.u32 %v122, 7
    %v124 = vsub.s32 1, %v123
    %v125 = vrot.slane %v116, %v124
    %v126 = vlaneseq
    %v127 = vshrl.u32 %v126, 7
    %v128 = vsub.s32 2, %v127
    %v129 = vrot.slane %v116, %v128
    %v130 = vlaneseq
    %v131 = vshrl.u32 %v130, 7
    %v132 = vsub.s32 3, %v131
    %v133 = vrot.slane %v116, %v132
    %v202 = vunpack.c.l.b16 %v52
    %v203 = vunpack.c.h.b16 %v52
    %v204 = vunpack.c.l.b16 %v53
    %v205 = vunpack.c.h.b16 %v53
    %v206 = vunpack.c.l.b16 %v54
    %v207 = vunpack.c.h.b16 %v54
    %v208 = vunpack.c.l.b16 %v55
    %v209 = vunpack.c.h.b16 %v55
    %v210 = vunpack.c.l.b16 %v56
    %v211 = vunpack.c.h.b16 %v56
    %v212 = vunpack.c.l.b16 %v57
    %v213 = vunpack.c.h.b16 %v57
    %v214 = vunpack.c.l.b16 %v58
    %v215 = vunpack.c.h.b16 %v58
    %v216 = vunpack.c.l.b16 %v59
    %v217 = vunpack.c.h.b16 %v59
    %v218 = vunpack.c.l.b16 %v60
    %v219 = vunpack.c.h.b16 %v60
    %v220 = vunpack.c.l.b16 %v61
    %v221 = vunpack.c.h.b16 %v61
    %v222 = vunpack.c.l.b16 %v62
    %v223 = vunpack.c.h.b16 %v62
    %v224 = vunpack.c.l.b16 %v63
    %v225 = vunpack.c.h.b16 %v63
    %v226 = vunpack.c.l.b16 %v64
    %v227 = vunpack.c.h.b16 %v64
    %v228 = vunpack.c.l.b16 %v65
    %v229 = vunpack.c.h.b16 %v65
    %v230 = vunpack.c.l.b16 %v66
    %v231 = vunpack.c.h.b16 %v66
    %v232 = vunpack.c.l.b16 %v67
    %v233 = vunpack.c.h.b16 %v67
    %v234 = vunpack.c.l.b16 %v68
    %v235 = vunpack.c.h.b16 %v68
    %v236 = vunpack.c.l.b16 %v69
    %v237 = vunpack.c.h.b16 %v69
    %v238 = vunpack.c.l.b16 %v70
    %v239 = vunpack.c.h.b16 %v70
    %v240 = vunpack.c.l.b16 %v71
    %v241 = vunpack.c.h.b16 %v71
    %v242 = vunpack.c.l.b16 %v72
    %v243 = vunpack.c.h.b16 %v72
    %v244 = vunpack.c.l.b16 %v73
    %v245 = vunpack.c.h.b16 %v73
    %v246 = vunpack.c.l.b16 %v74
    %v247 = vunpack.c.h.b16 %v74
    %v248 = vunpack.c.l.b16 %v75
    %v249 = vunpack.c.h.b16 %v75
    %v250 = vunpack.c.l.b16 %v76
    %v251 = vunpack.c.h.b16 %v76
    %v252 = vunpack.c.l.b16 %v77
    %v253 = vunpack.c.h.b16 %v77
    %v254 = vunpack.c.l.b16 %v78
    %v255 = vunpack.c.h.b16 %v78
    %v256 = vunpack.c.l.b16 %v79
    %v257 = vunpack.c.h.b16 %v79
    %v258 = vunpack.c.l.b16 %v80
    %v259 = vunpack.c.h.b16 %v80
    %v260 = vunpack.c.l.b16 %v81
    %v261 = vunpack.c.h.b16 %v81
    %v262 = vunpack.c.l.b16 %v82
    %v263 = vunpack.c.h.b16 %v82
    %v264 = vunpack.c.l.b16 %v83
    %v265 = vunpack.c.h.b16 %v83
    %v266 = vunpack.c.l.b16 %v84
    %v267 = vunpack.c.h.b16 %v84
    %v268 = vunpack.c.l.b16 %v85
    %v269 = vunpack.c.h.b16 %v85
    %v270 = vunpack.c.l.b16 %v86
    %v271 = vunpack.c.h.b16 %v86
    %v272 = vunpack.c.l.b16 %v87
    %v273 = vunpack.c.h.b16 %v87
    %v274 = vunpack.c.l.b16 %v88
    %v275 = vunpack.c.h.b16 %v88
    %v276 = vunpack.c.l.b16 %v89
    %v277 = vunpack.c.h.b16 %v89
    %v278 = vunpack.c.l.b16 %v90
    %v279 = vunpack.c.h.b16 %v90
    %v280 = vunpack.c.l.b16 %v91
    %v281 = vunpack.c.h.b16 %v91
    %v282 = vunpack.c.l.b16 %v92
    %v283 = vunpack.c.h.b16 %v92
    %v284 = vunpack.c.l.b16 %v93
    %v285 = vunpack.c.h.b16 %v93
    %v286 = vunpack.c.l.b16 %v94
    %v287 = vunpack.c.h.b16 %v94
    %v288 = vunpack.c.l.b16 %v95
    %v289 = vunpack.c.h.b16 %v95
    %v290 = vunpack.c.l.b16 %v96
    %v291 = vunpack.c.h.b16 %v96
    %v292 = vunpack.c.l.b16 %v97
    %v293 = vunpack.c.h.b16 %v97
    %v294 = vunpack.c.l.b16 %v98
    %v295 = vunpack.c.h.b16 %v98
    %v296 = vunpack.c.l.b16 %v99
    %v297 = vunpack.c.h.b16 %v99
    %v298 = vunpack.c.l.b16 %v100
    %v299 = vunpack.c.h.b16 %v100
    %v300 = vunpack.c.l.b16 %v101
    %v301 = vunpack.c.h.b16 %v101
    %v302 = vunpack.c.l.b16 %v102
    %v303 = vunpack.c.h.b16 %v102
    %v304 = vunpack.c.l.b16 %v103
    %v305 = vunpack.c.h.b16 %v103
    %v306 = vunpack.c.l.b16 %v104
    %v307 = vunpack.c.h.b16 %v104
    %v308 = vunpack.c.l.b16 %v105
    %v309 = vunpack.c.h.b16 %v105
    %v310 = vunpack.c.l.b16 %v106
    %v311 = vunpack.c.h.b16 %v106
    %v312 = vunpack.c.l.b16 %v107
    %v313 = vunpack.c.h.b16 %v107
    %v314 = vunpack.c.l.b16 %v108
    %v315 = vunpack.c.h.b16 %v108
    %v316 = vunpack.c.l.b16 %v109
    %v317 = vunpack.c.h.b16 %v109
    %v318 = vunpack.c.l.b16 %v110
    %v319 = vunpack.c.h.b16 %v110
    %v320 = vunpack.c.l.b16 %v111
    %v321 = vunpack.c.h.b16 %v111
    %v322 = vunpack.c.l.b16 %v112
    %v323 = vunpack.c.h.b16 %v112
    %v324 = vunpack.c.l.b16 %v113
    %v325 = vunpack.c.h.b16 %v113
    %v326 = vunpack.c.l.b16 %v114
    %v327 = vunpack.c.h.b16 %v114
    %v328 = vunpack.c.l.b16 %v115
    %v329 = vunpack.c.h.b16 %v115
    %v330 = vpack.c.b16 %v206, %v202
    %v331 = vpack.c.b16 %v207, %v203
    %v332 = vpack.c.b16 %v208, %v204
    %v333 = vpack.c.b16 %v209, %v205
    %v334 = vpack.c.b16 %v214, %v210
    %v335 = vpack.c.b16 %v215, %v211
    %v336 = vpack.c.b16 %v216, %v212
    %v337 = vpack.c.b16 %v217, %v213
    %v338 = vpack.c.b16 %v222, %v218
    %v339 = vpack.c.b16 %v223, %v219
    %v340 = vpack.c.b16 %v224, %v220
    %v341 = vpack.c.b16 %v225, %v221
    %v342 = vpack.c.b16 %v230, %v226
    %v343 = vpack.c.b16 %v231, %v227
    %v344 = vpack.c.b16 %v232, %v228
    %v345 = vpack.c.b16 %v233, %v229
    %v346 = vpack.c.b16 %v238, %v234
    %v347 = vpack.c.b16 %v239, %v235
    %v348 = vpack.c.b16 %v240, %v236
    %v349 = vpack.c.b16 %v241, %v237
    %v350 = vpack.c.b16 %v246, %v242
    %v351 = vpack.c.b16 %v247, %v243
    %v352 = vpack.c.b16 %v248, %v244
    %v353 = vpack.c.b16 %v249, %v245
    %v354 = vpack.c.b16 %v254, %v250
    %v355 = vpack.c.b16 %v255, %v251
    %v356 = vpack.c.b16 %v256, %v252
    %v357 = vpack.c.b16 %v257, %v253
    %v358 = vpack.c.b16 %v262, %v258
    %v359 = vpack.c.b16 %v263, %v259
    %v360 = vpack.c.b16 %v264, %v260
    %v361 = vpack.c.b16 %v265, %v261
    %v362 = vpack.c.b16 %v270, %v266
    %v363 = vpack.c.b16 %v271, %v267
    %v364 = vpack.c.b16 %v272, %v268
    %v365 = vpack.c.b16 %v273, %v269
    %v366 = vpack.c.b16 %v278, %v274
    %v367 = vpack.c.b16 %v279, %v275
    %v368 = vpack.c.b16 %v280, %v276
    %v369 = vpack.c.b16 %v281, %v277
    %v370 = vpack.c.b16 %v286, %v282
    %v371 = vpack.c.b16 %v287, %v283
    %v372 = vpack.c.b16 %v288, %v284
    %v373 = vpack.c.b16 %v289, %v285
    %v374 = vpack.c.b16 %v294, %v290
    %v375 = vpack.c.b16 %v295, %v291
    %v376 = vpack.c.b16 %v296, %v292
    %v377 = vpack.c.b16 %v297, %v293
    %v378 = vpack.c.b16 %v302, %v298
    %v379 = vpack.c.b16 %v303, %v299
    %v380 = vpack.c.b16 %v304, %v300
    %v381 = vpack.c.b16 %v305, %v301
    %v382 = vpack.c.b16 %v310, %v306
    %v383 = vpack.c.b16 %v311, %v307
    %v384 = vpack.c.b16 %v312, %v308
    %v385 = vpack.c.b16 %v313, %v309
    %v386 = vpack.c.b16 %v318, %v314
    %v387 = vpack.c.b16 %v319, %v315
    %v388 = vpack.c.b16 %v320, %v316
    %v389 = vpack.c.b16 %v321, %v317
    %v390 = vpack.c.b16 %v326, %v322
    %v391 = vpack.c.b16 %v327, %v323
    %v392 = vpack.c.b16 %v328, %v324
    %v393 = vpack.c.b16 %v329, %v325
    %458 = vmatprep.subr.bf16.mxu0 %v331
    %459 = vmatpush1.bf16.msra.mxu0 %v330
    %460 = vmatprep.subr.bf16.mxu0 %v335
    %461 = vmatpush1.bf16.msra.mxu0 %v334
    %462 = vmatprep.subr.bf16.mxu0 %v339
    %463 = vmatpush1.bf16.msra.mxu0 %v338
    %464 = vmatprep.subr.bf16.mxu0 %v343
    %465 = vmatpush1.bf16.msra.mxu0 %v342
    %466 = vmatprep.subr.bf16.mxu0 %v347
    %467 = vmatpush1.bf16.msra.mxu0 %v346
    %468 = vmatprep.subr.bf16.mxu0 %v351
    %469 = vmatpush1.bf16.msra.mxu0 %v350
    %470 = vmatprep.subr.bf16.mxu0 %v355
    %471 = vmatpush1.bf16.msra.mxu0 %v354
    %472 = vmatprep.subr.bf16.mxu0 %v359
    %473 = vmatpush1.bf16.msra.mxu0 %v358
    %474 = vmatprep.subr.bf16.mxu0 %v363
    %475 = vmatpush1.bf16.msra.mxu0 %v362
    %476 = vmatprep.subr.bf16.mxu0 %v367
    %477 = vmatpush1.bf16.msra.mxu0 %v366
    %478 = vmatprep.subr.bf16.mxu0 %v371
    %479 = vmatpush1.bf16.msra.mxu0 %v370
    %480 = vmatprep.subr.bf16.mxu0 %v375
    %481 = vmatpush1.bf16.msra.mxu0 %v374
    %482 = vmatprep.subr.bf16.mxu0 %v379
    %483 = vmatpush1.bf16.msra.mxu0 %v378
    %484 = vmatprep.subr.bf16.mxu0 %v383
    %485 = vmatpush1.bf16.msra.mxu0 %v382
    %486 = vmatprep.subr.bf16.mxu0 %v387
    %487 = vmatpush1.bf16.msra.mxu0 %v386
    %488 = vmatprep.subr.bf16.mxu0 %v391
    %489 = vmatpush1.bf16.msra.mxu0 %v390
    %490 = vmatprep.mubr.bf16.mxu0 %v51
    %491 = vmatmul.mubr.bf16.gmra.mrb[0].mxu0 %v50
    %v492 = vpop.f32.mrb[0].mxu0
    %v493 = vadd.f32 %v121, %v492
    %v494 = vpop.f32.mrb[0].mxu0
    %v495 = vadd.f32 %v125, %v494
    %v496 = vpop.f32.mrb[0].mxu0
    %v497 = vpop.f32.mrb[0].mxu0
    %498 = vdwg.mxu0
    %499 = vmatprep.subr.bf16.mxu0 %v333
    %500 = vmatpush1.bf16.msra.mxu0 %v332
    %501 = vmatprep.subr.bf16.mxu0 %v337
    %502 = vmatpush1.bf16.msra.mxu0 %v336
    %503 = vmatprep.subr.bf16.mxu0 %v341
    %504 = vmatpush1.bf16.msra.mxu0 %v340
    %505 = vmatprep.subr.bf16.mxu0 %v345
    %506 = vmatpush1.bf16.msra.mxu0 %v344
    %507 = vmatprep.subr.bf16.mxu0 %v349
    %508 = vmatpush1.bf16.msra.mxu0 %v348
    %509 = vmatprep.subr.bf16.mxu0 %v353
    %510 = vmatpush1.bf16.msra.mxu0 %v352
    %511 = vmatprep.subr.bf16.mxu0 %v357
    %512 = vmatpush1.bf16.msra.mxu0 %v356
    %513 = vmatprep.subr.bf16.mxu0 %v361
    %514 = vmatpush1.bf16.msra.mxu0 %v360
    %515 = vmatprep.subr.bf16.mxu0 %v365
    %516 = vmatpush1.bf16.msra.mxu0 %v364
    %517 = vmatprep.subr.bf16.mxu0 %v369
    %518 = vmatpush1.bf16.msra.mxu0 %v368
    %519 = vmatprep.subr.bf16.mxu0 %v373
    %520 = vmatpush1.bf16.msra.mxu0 %v372
    %521 = vmatprep.subr.bf16.mxu0 %v377
    %522 = vmatpush1.bf16.msra.mxu0 %v376
    %523 = vmatprep.subr.bf16.mxu0 %v381
    %524 = vmatpush1.bf16.msra.mxu0 %v380
    %525 = vmatprep.subr.bf16.mxu0 %v385
    %526 = vmatpush1.bf16.msra.mxu0 %v384
    %527 = vmatprep.subr.bf16.mxu0 %v389
    %528 = vmatpush1.bf16.msra.mxu0 %v388
    %529 = vmatprep.subr.bf16.mxu0 %v393
    %530 = vmatpush1.bf16.msra.mxu0 %v392
    %531 = vmatprep.mubr.bf16.mxu0 %v51
    %532 = vmatmul.mubr.bf16.gmra.mrb[0].mxu0 %v50
    %v533 = vpop.f32.mrb[0].mxu0
    %v534 = vadd.f32 %v129, %v533
    %v535 = vpop.f32.mrb[0].mxu0
    %v536 = vadd.f32 %v133, %v535
    %v537 = vpop.f32.mrb[0].mxu0
    %v538 = vpop.f32.mrb[0].mxu0
    %539 = vdwg.mxu0
    %v540 = vmax.f32 %v493, 0.0
    %v541 = vmax.f32 %v495, 0.0
    %v542 = vmax.f32 %v534, 0.0
    %v543 = vmax.f32 %v536, 0.0
    %v544 = vpack.c.bf16 %v540, %v540
    %v545 = vpack.c.bf16 %v541, %v541
    %v546 = vpack.c.bf16 %v542, %v542
    %v547 = vpack.c.bf16 %v543, %v543
    %v548 = vld [vmem:[#allocation4] sm:$0xff]
    %v549 = vld [vmem:[#allocation4 + $0x8] sm:$0xff]
    %v550 = vld [vmem:[#allocation4 + $0x10] sm:$0xff]
    %v551 = vld [vmem:[#allocation4 + $0x18] sm:$0xff]
    %v552 = vld [vmem:[#allocation4 + $0x20] sm:$0xff]
    %v553 = vld [vmem:[#allocation4 + $0x28] sm:$0xff]
    %v554 = vld [vmem:[#allocation4 + $0x30] sm:$0xff]
    %v555 = vld [vmem:[#allocation4 + $0x38] sm:$0xff]
    %v556 = vld [vmem:[#allocation4 + $0x40] sm:$0xff]
    %v557 = vld [vmem:[#allocation4 + $0x48] sm:$0xff]
    %v558 = vld [vmem:[#allocation4 + $0x50] sm:$0xff]
    %v559 = vld [vmem:[#allocation4 + $0x58] sm:$0xff]
    %v560 = vld [vmem:[#allocation4 + $0x60] sm:$0xff]
    %v561 = vld [vmem:[#allocation4 + $0x68] sm:$0xff]
    %v562 = vld [vmem:[#allocation4 + $0x70] sm:$0xff]
    %v563 = vld [vmem:[#allocation4 + $0x78] sm:$0xff]
    %v564 = vld [vmem:[#allocation4 + $0x80] sm:$0xff]
    %v565 = vld [vmem:[#allocation4 + $0x88] sm:$0xff]
    %v566 = vld [vmem:[#allocation4 + $0x90] sm:$0xff]
    %v567 = vld [vmem:[#allocation4 + $0x98] sm:$0xff]
    %v568 = vld [vmem:[#allocation4 + $0xa0] sm:$0xff]
    %v569 = vld [vmem:[#allocation4 + $0xa8] sm:$0xff]
    %v570 = vld [vmem:[#allocation4 + $0xb0] sm:$0xff]
    %v571 = vld [vmem:[#allocation4 + $0xb8] sm:$0xff]
    %v572 = vld [vmem:[#allocation4 + $0xc0] sm:$0xff]
    %v573 = vld [vmem:[#allocation4 + $0xc8] sm:$0xff]
    %v574 = vld [vmem:[#allocation4 + $0xd0] sm:$0xff]
    %v575 = vld [vmem:[#allocation4 + $0xd8] sm:$0xff]
    %v576 = vld [vmem:[#allocation4 + $0xe0] sm:$0xff]
    %v577 = vld [vmem:[#allocation4 + $0xe8] sm:$0xff]
    %v578 = vld [vmem:[#allocation4 + $0xf0] sm:$0xff]
    %v579 = vld [vmem:[#allocation4 + $0xf8] sm:$0xff]
    %v580 = vld [vmem:[#allocation4 + $0x100] sm:$0xff]
    %v581 = vld [vmem:[#allocation4 + $0x108] sm:$0xff]
    %v582 = vld [vmem:[#allocation4 + $0x110] sm:$0xff]
    %v583 = vld [vmem:[#allocation4 + $0x118] sm:$0xff]
    %v584 = vld [vmem:[#allocation4 + $0x120] sm:$0xff]
    %v585 = vld [vmem:[#allocation4 + $0x128] sm:$0xff]
    %v586 = vld [vmem:[#allocation4 + $0x130] sm:$0xff]
    %v587 = vld [vmem:[#allocation4 + $0x138] sm:$0xff]
    %v588 = vld [vmem:[#allocation4 + $0x140] sm:$0xff]
    %v589 = vld [vmem:[#allocation4 + $0x148] sm:$0xff]
    %v590 = vld [vmem:[#allocation4 + $0x150] sm:$0xff]
    %v591 = vld [vmem:[#allocation4 + $0x158] sm:$0xff]
    %v592 = vld [vmem:[#allocation4 + $0x160] sm:$0xff]
    %v593 = vld [vmem:[#allocation4 + $0x168] sm:$0xff]
    %v594 = vld [vmem:[#allocation4 + $0x170] sm:$0xff]
    %v595 = vld [vmem:[#allocation4 + $0x178] sm:$0xff]
    %v596 = vld [vmem:[#allocation4 + $0x180] sm:$0xff]
    %v597 = vld [vmem:[#allocation4 + $0x188] sm:$0xff]
    %v598 = vld [vmem:[#allocation4 + $0x190] sm:$0xff]
    %v599 = vld [vmem:[#allocation4 + $0x198] sm:$0xff]
    %v600 = vld [vmem:[#allocation4 + $0x1a0] sm:$0xff]
    %v601 = vld [vmem:[#allocation4 + $0x1a8] sm:$0xff]
    %v602 = vld [vmem:[#allocation4 + $0x1b0] sm:$0xff]
    %v603 = vld [vmem:[#allocation4 + $0x1b8] sm:$0xff]
    %v604 = vld [vmem:[#allocation4 + $0x1c0] sm:$0xff]
    %v605 = vld [vmem:[#allocation4 + $0x1c8] sm:$0xff]
    %v606 = vld [vmem:[#allocation4 + $0x1d0] sm:$0xff]
    %v607 = vld [vmem:[#allocation4 + $0x1d8] sm:$0xff]
    %v608 = vld [vmem:[#allocation4 + $0x1e0] sm:$0xff]
    %v609 = vld [vmem:[#allocation4 + $0x1e8] sm:$0xff]
    %v610 = vld [vmem:[#allocation4 + $0x1f0] sm:$0xff]
    %v611 = vld [vmem:[#allocation4 + $0x1f8] sm:$0xff]
    %v612 = vld [vmem:[#allocation4 + $0x200] sm:$0xff]
    %v613 = vld [vmem:[#allocation4 + $0x208] sm:$0xff]
    %v614 = vld [vmem:[#allocation4 + $0x210] sm:$0xff]
    %v615 = vld [vmem:[#allocation4 + $0x218] sm:$0xff]
    %v616 = vld [vmem:[#allocation4 + $0x220] sm:$0xff]
    %v617 = vld [vmem:[#allocation4 + $0x228] sm:$0xff]
    %v618 = vld [vmem:[#allocation4 + $0x230] sm:$0xff]
    %v619 = vld [vmem:[#allocation4 + $0x238] sm:$0xff]
    %v620 = vld [vmem:[#allocation4 + $0x240] sm:$0xff]
    %v621 = vld [vmem:[#allocation4 + $0x248] sm:$0xff]
    %v622 = vld [vmem:[#allocation4 + $0x250] sm:$0xff]
    %v623 = vld [vmem:[#allocation4 + $0x258] sm:$0xff]
    %v624 = vld [vmem:[#allocation4 + $0x260] sm:$0xff]
    %v625 = vld [vmem:[#allocation4 + $0x268] sm:$0xff]
    %v626 = vld [vmem:[#allocation4 + $0x270] sm:$0xff]
    %v627 = vld [vmem:[#allocation4 + $0x278] sm:$0xff]
    %v628 = vld [vmem:[#allocation4 + $0x280] sm:$0xff]
    %v629 = vld [vmem:[#allocation4 + $0x288] sm:$0xff]
    %v630 = vld [vmem:[#allocation4 + $0x290] sm:$0xff]
    %v631 = vld [vmem:[#allocation4 + $0x298] sm:$0xff]
    %v632 = vld [vmem:[#allocation4 + $0x2a0] sm:$0xff]
    %v633 = vld [vmem:[#allocation4 + $0x2a8] sm:$0xff]
    %v634 = vld [vmem:[#allocation4 + $0x2b0] sm:$0xff]
    %v635 = vld [vmem:[#allocation4 + $0x2b8] sm:$0xff]
    %v636 = vld [vmem:[#allocation4 + $0x2c0] sm:$0xff]
    %v637 = vld [vmem:[#allocation4 + $0x2c8] sm:$0xff]
    %v638 = vld [vmem:[#allocation4 + $0x2d0] sm:$0xff]
    %v639 = vld [vmem:[#allocation4 + $0x2d8] sm:$0xff]
    %v640 = vld [vmem:[#allocation4 + $0x2e0] sm:$0xff]
    %v641 = vld [vmem:[#allocation4 + $0x2e8] sm:$0xff]
    %v642 = vld [vmem:[#allocation4 + $0x2f0] sm:$0xff]
    %v643 = vld [vmem:[#allocation4 + $0x2f8] sm:$0xff]
    %v644 = vld [vmem:[#allocation4 + $0x300] sm:$0xff]
    %v645 = vld [vmem:[#allocation4 + $0x308] sm:$0xff]
    %v646 = vld [vmem:[#allocation4 + $0x310] sm:$0xff]
    %v647 = vld [vmem:[#allocation4 + $0x318] sm:$0xff]
    %v648 = vld [vmem:[#allocation4 + $0x320] sm:$0xff]
    %v649 = vld [vmem:[#allocation4 + $0x328] sm:$0xff]
    %v650 = vld [vmem:[#allocation4 + $0x330] sm:$0xff]
    %v651 = vld [vmem:[#allocation4 + $0x338] sm:$0xff]
    %v652 = vld [vmem:[#allocation4 + $0x340] sm:$0xff]
    %v653 = vld [vmem:[#allocation4 + $0x348] sm:$0xff]
    %v654 = vld [vmem:[#allocation4 + $0x350] sm:$0xff]
    %v655 = vld [vmem:[#allocation4 + $0x358] sm:$0xff]
    %v656 = vld [vmem:[#allocation4 + $0x360] sm:$0xff]
    %v657 = vld [vmem:[#allocation4 + $0x368] sm:$0xff]
    %v658 = vld [vmem:[#allocation4 + $0x370] sm:$0xff]
    %v659 = vld [vmem:[#allocation4 + $0x378] sm:$0xff]
    %v660 = vld [vmem:[#allocation4 + $0x380] sm:$0xff]
    %v661 = vld [vmem:[#allocation4 + $0x388] sm:$0xff]
    %v662 = vld [vmem:[#allocation4 + $0x390] sm:$0xff]
    %v663 = vld [vmem:[#allocation4 + $0x398] sm:$0xff]
    %v664 = vld [vmem:[#allocation4 + $0x3a0] sm:$0xff]
    %v665 = vld [vmem:[#allocation4 + $0x3a8] sm:$0xff]
    %v666 = vld [vmem:[#allocation4 + $0x3b0] sm:$0xff]
    %v667 = vld [vmem:[#allocation4 + $0x3b8] sm:$0xff]
    %v668 = vld [vmem:[#allocation4 + $0x3c0] sm:$0xff]
    %v669 = vld [vmem:[#allocation4 + $0x3c8] sm:$0xff]
    %v670 = vld [vmem:[#allocation4 + $0x3d0] sm:$0xff]
    %v671 = vld [vmem:[#allocation4 + $0x3d8] sm:$0xff]
    %v672 = vld [vmem:[#allocation4 + $0x3e0] sm:$0xff]
    %v673 = vld [vmem:[#allocation4 + $0x3e8] sm:$0xff]
    %v674 = vld [vmem:[#allocation4 + $0x3f0] sm:$0xff]
    %v675 = vld [vmem:[#allocation4 + $0x3f8] sm:$0xff]
    %v676 = vld [vmem:[#allocation4 + $0x400] sm:$0xff]
    %v677 = vld [vmem:[#allocation4 + $0x408] sm:$0xff]
    %v678 = vld [vmem:[#allocation4 + $0x410] sm:$0xff]
    %v679 = vld [vmem:[#allocation4 + $0x418] sm:$0xff]
    %v680 = vld [vmem:[#allocation4 + $0x420] sm:$0xff]
    %v681 = vld [vmem:[#allocation4 + $0x428] sm:$0xff]
    %v682 = vld [vmem:[#allocation4 + $0x430] sm:$0xff]
    %v683 = vld [vmem:[#allocation4 + $0x438] sm:$0xff]
    %v684 = vld [vmem:[#allocation4 + $0x440] sm:$0xff]
    %v685 = vld [vmem:[#allocation4 + $0x448] sm:$0xff]
    %v686 = vld [vmem:[#allocation4 + $0x450] sm:$0xff]
    %v687 = vld [vmem:[#allocation4 + $0x458] sm:$0xff]
    %v688 = vld [vmem:[#allocation4 + $0x460] sm:$0xff]
    %v689 = vld [vmem:[#allocation4 + $0x468] sm:$0xff]
    %v690 = vld [vmem:[#allocation4 + $0x470] sm:$0xff]
    %v691 = vld [vmem:[#allocation4 + $0x478] sm:$0xff]
    %v692 = vld [vmem:[#allocation4 + $0x480] sm:$0xff]
    %v693 = vld [vmem:[#allocation4 + $0x488] sm:$0xff]
    %v694 = vld [vmem:[#allocation4 + $0x490] sm:$0xff]
    %v695 = vld [vmem:[#allocation4 + $0x498] sm:$0xff]
    %v696 = vld [vmem:[#allocation4 + $0x4a0] sm:$0xff]
    %v697 = vld [vmem:[#allocation4 + $0x4a8] sm:$0xff]
    %v698 = vld [vmem:[#allocation4 + $0x4b0] sm:$0xff]
    %v699 = vld [vmem:[#allocation4 + $0x4b8] sm:$0xff]
    %v700 = vld [vmem:[#allocation4 + $0x4c0] sm:$0xff]
    %v701 = vld [vmem:[#allocation4 + $0x4c8] sm:$0xff]
    %v702 = vld [vmem:[#allocation4 + $0x4d0] sm:$0xff]
    %v703 = vld [vmem:[#allocation4 + $0x4d8] sm:$0xff]
    %v704 = vld [vmem:[#allocation4 + $0x4e0] sm:$0xff]
    %v705 = vld [vmem:[#allocation4 + $0x4e8] sm:$0xff]
    %v706 = vld [vmem:[#allocation4 + $0x4f0] sm:$0xff]
    %v707 = vld [vmem:[#allocation4 + $0x4f8] sm:$0xff]
    %v708 = vld [vmem:[#allocation4 + $0x500] sm:$0xff]
    %v709 = vld [vmem:[#allocation4 + $0x508] sm:$0xff]
    %v710 = vld [vmem:[#allocation4 + $0x510] sm:$0xff]
    %v711 = vld [vmem:[#allocation4 + $0x518] sm:$0xff]
    %v712 = vld [vmem:[#allocation4 + $0x520] sm:$0xff]
    %v713 = vld [vmem:[#allocation4 + $0x528] sm:$0xff]
    %v714 = vld [vmem:[#allocation4 + $0x530] sm:$0xff]
    %v715 = vld [vmem:[#allocation4 + $0x538] sm:$0xff]
    %v716 = vld [vmem:[#allocation4 + $0x540] sm:$0xff]
    %v717 = vld [vmem:[#allocation4 + $0x548] sm:$0xff]
    %v718 = vld [vmem:[#allocation4 + $0x550] sm:$0xff]
    %v719 = vld [vmem:[#allocation4 + $0x558] sm:$0xff]
    %v720 = vld [vmem:[#allocation4 + $0x560] sm:$0xff]
    %v721 = vld [vmem:[#allocation4 + $0x568] sm:$0xff]
    %v722 = vld [vmem:[#allocation4 + $0x570] sm:$0xff]
    %v723 = vld [vmem:[#allocation4 + $0x578] sm:$0xff]
    %v724 = vld [vmem:[#allocation4 + $0x580] sm:$0xff]
    %v725 = vld [vmem:[#allocation4 + $0x588] sm:$0xff]
    %v726 = vld [vmem:[#allocation4 + $0x590] sm:$0xff]
    %v727 = vld [vmem:[#allocation4 + $0x598] sm:$0xff]
    %v728 = vld [vmem:[#allocation4 + $0x5a0] sm:$0xff]
    %v729 = vld [vmem:[#allocation4 + $0x5a8] sm:$0xff]
    %v730 = vld [vmem:[#allocation4 + $0x5b0] sm:$0xff]
    %v731 = vld [vmem:[#allocation4 + $0x5b8] sm:$0xff]
    %v732 = vld [vmem:[#allocation4 + $0x5c0] sm:$0xff]
    %v733 = vld [vmem:[#allocation4 + $0x5c8] sm:$0xff]
    %v734 = vld [vmem:[#allocation4 + $0x5d0] sm:$0xff]
    %v735 = vld [vmem:[#allocation4 + $0x5d8] sm:$0xff]
    %v736 = vld [vmem:[#allocation4 + $0x5e0] sm:$0xff]
    %v737 = vld [vmem:[#allocation4 + $0x5e8] sm:$0xff]
    %v738 = vld [vmem:[#allocation4 + $0x5f0] sm:$0xff]
    %v739 = vld [vmem:[#allocation4 + $0x5f8] sm:$0xff]
    %v740 = vld [vmem:[%s4] sm:$0x3f]
    %v742 = vlaneseq
    %v743 = vshrl.u32 %v742, 7
    %v744 = vsub.s32 0, %v743
    %v745 = vrot.slane %v740, %v744
    %v746 = vlaneseq
    %v747 = vshrl.u32 %v746, 7
    %v748 = vsub.s32 1, %v747
    %v749 = vrot.slane %v740, %v748
    %v750 = vlaneseq
    %v751 = vshrl.u32 %v750, 7
    %v752 = vsub.s32 2, %v751
    %v753 = vrot.slane %v740, %v752
    %v754 = vlaneseq
    %v755 = vshrl.u32 %v754, 7
    %v756 = vsub.s32 3, %v755
    %v757 = vrot.slane %v740, %v756
    %v758 = vlaneseq
    %v759 = vshrl.u32 %v758, 7
    %v760 = vsub.s32 4, %v759
    %v761 = vrot.slane %v740, %v760
    %v762 = vlaneseq
    %v763 = vshrl.u32 %v762, 7
    %v764 = vsub.s32 5, %v763
    %v765 = vrot.slane %v740, %v764
    %v964 = vunpack.c.l.b16 %v548
    %v965 = vunpack.c.h.b16 %v548
    %v966 = vunpack.c.l.b16 %v549
    %v967 = vunpack.c.h.b16 %v549
    %v968 = vunpack.c.l.b16 %v550
    %v969 = vunpack.c.h.b16 %v550
    %v970 = vunpack.c.l.b16 %v551
    %v971 = vunpack.c.h.b16 %v551
    %v972 = vunpack.c.l.b16 %v552
    %v973 = vunpack.c.h.b16 %v552
    %v974 = vunpack.c.l.b16 %v553
    %v975 = vunpack.c.h.b16 %v553
    %v976 = vunpack.c.l.b16 %v554
    %v977 = vunpack.c.h.b16 %v554
    %v978 = vunpack.c.l.b16 %v555
    %v979 = vunpack.c.h.b16 %v555
    %v980 = vunpack.c.l.b16 %v556
    %v981 = vunpack.c.h.b16 %v556
    %v982 = vunpack.c.l.b16 %v557
    %v983 = vunpack.c.h.b16 %v557
    %v984 = vunpack.c.l.b16 %v558
    %v985 = vunpack.c.h.b16 %v558
    %v986 = vunpack.c.l.b16 %v559
    %v987 = vunpack.c.h.b16 %v559
    %v988 = vunpack.c.l.b16 %v560
    %v989 = vunpack.c.h.b16 %v560
    %v990 = vunpack.c.l.b16 %v561
    %v991 = vunpack.c.h.b16 %v561
    %v992 = vunpack.c.l.b16 %v562
    %v993 = vunpack.c.h.b16 %v562
    %v994 = vunpack.c.l.b16 %v563
    %v995 = vunpack.c.h.b16 %v563
    %v996 = vunpack.c.l.b16 %v564
    %v997 = vunpack.c.h.b16 %v564
    %v998 = vunpack.c.l.b16 %v565
    %v999 = vunpack.c.h.b16 %v565
    %v1000 = vunpack.c.l.b16 %v566
    %v1001 = vunpack.c.h.b16 %v566
    %v1002 = vunpack.c.l.b16 %v567
    %v1003 = vunpack.c.h.b16 %v567
    %v1004 = vunpack.c.l.b16 %v568
    %v1005 = vunpack.c.h.b16 %v568
    %v1006 = vunpack.c.l.b16 %v569
    %v1007 = vunpack.c.h.b16 %v569
    %v1008 = vunpack.c.l.b16 %v570
    %v1009 = vunpack.c.h.b16 %v570
    %v1010 = vunpack.c.l.b16 %v571
    %v1011 = vunpack.c.h.b16 %v571
    %v1012 = vunpack.c.l.b16 %v572
    %v1013 = vunpack.c.h.b16 %v572
    %v1014 = vunpack.c.l.b16 %v573
    %v1015 = vunpack.c.h.b16 %v573
    %v1016 = vunpack.c.l.b16 %v574
    %v1017 = vunpack.c.h.b16 %v574
    %v1018 = vunpack.c.l.b16 %v575
    %v1019 = vunpack.c.h.b16 %v575
    %v1020 = vunpack.c.l.b16 %v576
    %v1021 = vunpack.c.h.b16 %v576
    %v1022 = vunpack.c.l.b16 %v577
    %v1023 = vunpack.c.h.b16 %v577
    %v1024 = vunpack.c.l.b16 %v578
    %v1025 = vunpack.c.h.b16 %v578
    %v1026 = vunpack.c.l.b16 %v579
    %v1027 = vunpack.c.h.b16 %v579
    %v1028 = vunpack.c.l.b16 %v580
    %v1029 = vunpack.c.h.b16 %v580
    %v1030 = vunpack.c.l.b16 %v581
    %v1031 = vunpack.c.h.b16 %v581
    %v1032 = vunpack.c.l.b16 %v582
    %v1033 = vunpack.c.h.b16 %v582
    %v1034 = vunpack.c.l.b16 %v583
    %v1035 = vunpack.c.h.b16 %v583
    %v1036 = vunpack.c.l.b16 %v584
    %v1037 = vunpack.c.h.b16 %v584
    %v1038 = vunpack.c.l.b16 %v585
    %v1039 = vunpack.c.h.b16 %v585
    %v1040 = vunpack.c.l.b16 %v586
    %v1041 = vunpack.c.h.b16 %v586
    %v1042 = vunpack.c.l.b16 %v587
    %v1043 = vunpack.c.h.b16 %v587
    %v1044 = vunpack.c.l.b16 %v588
    %v1045 = vunpack.c.h.b16 %v588
    %v1046 = vunpack.c.l.b16 %v589
    %v1047 = vunpack.c.h.b16 %v589
    %v1048 = vunpack.c.l.b16 %v590
    %v1049 = vunpack.c.h.b16 %v590
    %v1050 = vunpack.c.l.b16 %v591
    %v1051 = vunpack.c.h.b16 %v591
    %v1052 = vunpack.c.l.b16 %v592
    %v1053 = vunpack.c.h.b16 %v592
    %v1054 = vunpack.c.l.b16 %v593
    %v1055 = vunpack.c.h.b16 %v593
    %v1056 = vunpack.c.l.b16 %v594
    %v1057 = vunpack.c.h.b16 %v594
    %v1058 = vunpack.c.l.b16 %v595
    %v1059 = vunpack.c.h.b16 %v595
    %v1060 = vunpack.c.l.b16 %v596
    %v1061 = vunpack.c.h.b16 %v596
    %v1062 = vunpack.c.l.b16 %v597
    %v1063 = vunpack.c.h.b16 %v597
    %v1064 = vunpack.c.l.b16 %v598
    %v1065 = vunpack.c.h.b16 %v598
    %v1066 = vunpack.c.l.b16 %v599
    %v1067 = vunpack.c.h.b16 %v599
    %v1068 = vunpack.c.l.b16 %v600
    %v1069 = vunpack.c.h.b16 %v600
    %v1070 = vunpack.c.l.b16 %v601
    %v1071 = vunpack.c.h.b16 %v601
    %v1072 = vunpack.c.l.b16 %v602
    %v1073 = vunpack.c.h.b16 %v602
    %v1074 = vunpack.c.l.b16 %v603
    %v1075 = vunpack.c.h.b16 %v603
    %v1076 = vunpack.c.l.b16 %v604
    %v1077 = vunpack.c.h.b16 %v604
    %v1078 = vunpack.c.l.b16 %v605
    %v1079 = vunpack.c.h.b16 %v605
    %v1080 = vunpack.c.l.b16 %v606
    %v1081 = vunpack.c.h.b16 %v606
    %v1082 = vunpack.c.l.b16 %v607
    %v1083 = vunpack.c.h.b16 %v607
    %v1084 = vunpack.c.l.b16 %v608
    %v1085 = vunpack.c.h.b16 %v608
    %v1086 = vunpack.c.l.b16 %v609
    %v1087 = vunpack.c.h.b16 %v609
    %v1088 = vunpack.c.l.b16 %v610
    %v1089 = vunpack.c.h.b16 %v610
    %v1090 = vunpack.c.l.b16 %v611
    %v1091 = vunpack.c.h.b16 %v611
    %v1092 = vunpack.c.l.b16 %v612
    %v1093 = vunpack.c.h.b16 %v612
    %v1094 = vunpack.c.l.b16 %v613
    %v1095 = vunpack.c.h.b16 %v613
    %v1096 = vunpack.c.l.b16 %v614
    %v1097 = vunpack.c.h.b16 %v614
    %v1098 = vunpack.c.l.b16 %v615
    %v1099 = vunpack.c.h.b16 %v615
    %v1100 = vunpack.c.l.b16 %v616
    %v1101 = vunpack.c.h.b16 %v616
    %v1102 = vunpack.c.l.b16 %v617
    %v1103 = vunpack.c.h.b16 %v617
    %v1104 = vunpack.c.l.b16 %v618
    %v1105 = vunpack.c.h.b16 %v618
    %v1106 = vunpack.c.l.b16 %v619
    %v1107 = vunpack.c.h.b16 %v619
    %v1108 = vunpack.c.l.b16 %v620
    %v1109 = vunpack.c.h.b16 %v620
    %v1110 = vunpack.c.l.b16 %v621
    %v1111 = vunpack.c.h.b16 %v621
    %v1112 = vunpack.c.l.b16 %v622
    %v1113 = vunpack.c.h.b16 %v622
    %v1114 = vunpack.c.l.b16 %v623
    %v1115 = vunpack.c.h.b16 %v623
    %v1116 = vunpack.c.l.b16 %v624
    %v1117 = vunpack.c.h.b16 %v624
    %v1118 = vunpack.c.l.b16 %v625
    %v1119 = vunpack.c.h.b16 %v625
    %v1120 = vunpack.c.l.b16 %v626
    %v1121 = vunpack.c.h.b16 %v626
    %v1122 = vunpack.c.l.b16 %v627
    %v1123 = vunpack.c.h.b16 %v627
    %v1124 = vunpack.c.l.b16 %v628
    %v1125 = vunpack.c.h.b16 %v628
    %v1126 = vunpack.c.l.b16 %v629
    %v1127 = vunpack.c.h.b16 %v629
    %v1128 = vunpack.c.l.b16 %v630
    %v1129 = vunpack.c.h.b16 %v630
    %v1130 = vunpack.c.l.b16 %v631
    %v1131 = vunpack.c.h.b16 %v631
    %v1132 = vunpack.c.l.b16 %v632
    %v1133 = vunpack.c.h.b16 %v632
    %v1134 = vunpack.c.l.b16 %v633
    %v1135 = vunpack.c.h.b16 %v633
    %v1136 = vunpack.c.l.b16 %v634
    %v1137 = vunpack.c.h.b16 %v634
    %v1138 = vunpack.c.l.b16 %v635
    %v1139 = vunpack.c.h.b16 %v635
    %v1140 = vunpack.c.l.b16 %v636
    %v1141 = vunpack.c.h.b16 %v636
    %v1142 = vunpack.c.l.b16 %v637
    %v1143 = vunpack.c.h.b16 %v637
    %v1144 = vunpack.c.l.b16 %v638
    %v1145 = vunpack.c.h.b16 %v638
    %v1146 = vunpack.c.l.b16 %v639
    %v1147 = vunpack.c.h.b16 %v639
    %v1148 = vunpack.c.l.b16 %v640
    %v1149 = vunpack.c.h.b16 %v640
    %v1150 = vunpack.c.l.b16 %v641
    %v1151 = vunpack.c.h.b16 %v641
    %v1152 = vunpack.c.l.b16 %v642
    %v1153 = vunpack.c.h.b16 %v642
    %v1154 = vunpack.c.l.b16 %v643
    %v1155 = vunpack.c.h.b16 %v643
    %v1156 = vunpack.c.l.b16 %v644
    %v1157 = vunpack.c.h.b16 %v644
    %v1158 = vunpack.c.l.b16 %v645
    %v1159 = vunpack.c.h.b16 %v645
    %v1160 = vunpack.c.l.b16 %v646
    %v1161 = vunpack.c.h.b16 %v646
    %v1162 = vunpack.c.l.b16 %v647
    %v1163 = vunpack.c.h.b16 %v647
    %v1164 = vunpack.c.l.b16 %v648
    %v1165 = vunpack.c.h.b16 %v648
    %v1166 = vunpack.c.l.b16 %v649
    %v1167 = vunpack.c.h.b16 %v649
    %v1168 = vunpack.c.l.b16 %v650
    %v1169 = vunpack.c.h.b16 %v650
    %v1170 = vunpack.c.l.b16 %v651
    %v1171 = vunpack.c.h.b16 %v651
    %v1172 = vunpack.c.l.b16 %v652
    %v1173 = vunpack.c.h.b16 %v652
    %v1174 = vunpack.c.l.b16 %v653
    %v1175 = vunpack.c.h.b16 %v653
    %v1176 = vunpack.c.l.b16 %v654
    %v1177 = vunpack.c.h.b16 %v654
    %v1178 = vunpack.c.l.b16 %v655
    %v1179 = vunpack.c.h.b16 %v655
    %v1180 = vunpack.c.l.b16 %v656
    %v1181 = vunpack.c.h.b16 %v656
    %v1182 = vunpack.c.l.b16 %v657
    %v1183 = vunpack.c.h.b16 %v657
    %v1184 = vunpack.c.l.b16 %v658
    %v1185 = vunpack.c.h.b16 %v658
    %v1186 = vunpack.c.l.b16 %v659
    %v1187 = vunpack.c.h.b16 %v659
    %v1188 = vunpack.c.l.b16 %v660
    %v1189 = vunpack.c.h.b16 %v660
    %v1190 = vunpack.c.l.b16 %v661
    %v1191 = vunpack.c.h.b16 %v661
    %v1192 = vunpack.c.l.b16 %v662
    %v1193 = vunpack.c.h.b16 %v662
    %v1194 = vunpack.c.l.b16 %v663
    %v1195 = vunpack.c.h.b16 %v663
    %v1196 = vunpack.c.l.b16 %v664
    %v1197 = vunpack.c.h.b16 %v664
    %v1198 = vunpack.c.l.b16 %v665
    %v1199 = vunpack.c.h.b16 %v665
    %v1200 = vunpack.c.l.b16 %v666
    %v1201 = vunpack.c.h.b16 %v666
    %v1202 = vunpack.c.l.b16 %v667
    %v1203 = vunpack.c.h.b16 %v667
    %v1204 = vunpack.c.l.b16 %v668
    %v1205 = vunpack.c.h.b16 %v668
    %v1206 = vunpack.c.l.b16 %v669
    %v1207 = vunpack.c.h.b16 %v669
    %v1208 = vunpack.c.l.b16 %v670
    %v1209 = vunpack.c.h.b16 %v670
    %v1210 = vunpack.c.l.b16 %v671
    %v1211 = vunpack.c.h.b16 %v671
    %v1212 = vunpack.c.l.b16 %v672
    %v1213 = vunpack.c.h.b16 %v672
    %v1214 = vunpack.c.l.b16 %v673
    %v1215 = vunpack.c.h.b16 %v673
    %v1216 = vunpack.c.l.b16 %v674
    %v1217 = vunpack.c.h.b16 %v674
    %v1218 = vunpack.c.l.b16 %v675
    %v1219 = vunpack.c.h.b16 %v675
    %v1220 = vunpack.c.l.b16 %v676
    %v1221 = vunpack.c.h.b16 %v676
    %v1222 = vunpack.c.l.b16 %v677
    %v1223 = vunpack.c.h.b16 %v677
    %v1224 = vunpack.c.l.b16 %v678
    %v1225 = vunpack.c.h.b16 %v678
    %v1226 = vunpack.c.l.b16 %v679
    %v1227 = vunpack.c.h.b16 %v679
    %v1228 = vunpack.c.l.b16 %v680
    %v1229 = vunpack.c.h.b16 %v680
    %v1230 = vunpack.c.l.b16 %v681
    %v1231 = vunpack.c.h.b16 %v681
    %v1232 = vunpack.c.l.b16 %v682
    %v1233 = vunpack.c.h.b16 %v682
    %v1234 = vunpack.c.l.b16 %v683
    %v1235 = vunpack.c.h.b16 %v683
    %v1236 = vunpack.c.l.b16 %v684
    %v1237 = vunpack.c.h.b16 %v684
    %v1238 = vunpack.c.l.b16 %v685
    %v1239 = vunpack.c.h.b16 %v685
    %v1240 = vunpack.c.l.b16 %v686
    %v1241 = vunpack.c.h.b16 %v686
    %v1242 = vunpack.c.l.b16 %v687
    %v1243 = vunpack.c.h.b16 %v687
    %v1244 = vunpack.c.l.b16 %v688
    %v1245 = vunpack.c.h.b16 %v688
    %v1246 = vunpack.c.l.b16 %v689
    %v1247 = vunpack.c.h.b16 %v689
    %v1248 = vunpack.c.l.b16 %v690
    %v1249 = vunpack.c.h.b16 %v690
    %v1250 = vunpack.c.l.b16 %v691
    %v1251 = vunpack.c.h.b16 %v691
    %v1252 = vunpack.c.l.b16 %v692
    %v1253 = vunpack.c.h.b16 %v692
    %v1254 = vunpack.c.l.b16 %v693
    %v1255 = vunpack.c.h.b16 %v693
    %v1256 = vunpack.c.l.b16 %v694
    %v1257 = vunpack.c.h.b16 %v694
    %v1258 = vunpack.c.l.b16 %v695
    %v1259 = vunpack.c.h.b16 %v695
    %v1260 = vunpack.c.l.b16 %v696
    %v1261 = vunpack.c.h.b16 %v696
    %v1262 = vunpack.c.l.b16 %v697
    %v1263 = vunpack.c.h.b16 %v697
    %v1264 = vunpack.c.l.b16 %v698
    %v1265 = vunpack.c.h.b16 %v698
    %v1266 = vunpack.c.l.b16 %v699
    %v1267 = vunpack.c.h.b16 %v699
    %v1268 = vunpack.c.l.b16 %v700
    %v1269 = vunpack.c.h.b16 %v700
    %v1270 = vunpack.c.l.b16 %v701
    %v1271 = vunpack.c.h.b16 %v701
    %v1272 = vunpack.c.l.b16 %v702
    %v1273 = vunpack.c.h.b16 %v702
    %v1274 = vunpack.c.l.b16 %v703
    %v1275 = vunpack.c.h.b16 %v703
    %v1276 = vunpack.c.l.b16 %v704
    %v1277 = vunpack.c.h.b16 %v704
    %v1278 = vunpack.c.l.b16 %v705
    %v1279 = vunpack.c.h.b16 %v705
    %v1280 = vunpack.c.l.b16 %v706
    %v1281 = vunpack.c.h.b16 %v706
    %v1282 = vunpack.c.l.b16 %v707
    %v1283 = vunpack.c.h.b16 %v707
    %v1284 = vunpack.c.l.b16 %v708
    %v1285 = vunpack.c.h.b16 %v708
    %v1286 = vunpack.c.l.b16 %v709
    %v1287 = vunpack.c.h.b16 %v709
    %v1288 = vunpack.c.l.b16 %v710
    %v1289 = vunpack.c.h.b16 %v710
    %v1290 = vunpack.c.l.b16 %v711
    %v1291 = vunpack.c.h.b16 %v711
    %v1292 = vunpack.c.l.b16 %v712
    %v1293 = vunpack.c.h.b16 %v712
    %v1294 = vunpack.c.l.b16 %v713
    %v1295 = vunpack.c.h.b16 %v713
    %v1296 = vunpack.c.l.b16 %v714
    %v1297 = vunpack.c.h.b16 %v714
    %v1298 = vunpack.c.l.b16 %v715
    %v1299 = vunpack.c.h.b16 %v715
    %v1300 = vunpack.c.l.b16 %v716
    %v1301 = vunpack.c.h.b16 %v716
    %v1302 = vunpack.c.l.b16 %v717
    %v1303 = vunpack.c.h.b16 %v717
    %v1304 = vunpack.c.l.b16 %v718
    %v1305 = vunpack.c.h.b16 %v718
    %v1306 = vunpack.c.l.b16 %v719
    %v1307 = vunpack.c.h.b16 %v719
    %v1308 = vunpack.c.l.b16 %v720
    %v1309 = vunpack.c.h.b16 %v720
    %v1310 = vunpack.c.l.b16 %v721
    %v1311 = vunpack.c.h.b16 %v721
    %v1312 = vunpack.c.l.b16 %v722
    %v1313 = vunpack.c.h.b16 %v722
    %v1314 = vunpack.c.l.b16 %v723
    %v1315 = vunpack.c.h.b16 %v723
    %v1316 = vunpack.c.l.b16 %v724
    %v1317 = vunpack.c.h.b16 %v724
    %v1318 = vunpack.c.l.b16 %v725
    %v1319 = vunpack.c.h.b16 %v725
    %v1320 = vunpack.c.l.b16 %v726
    %v1321 = vunpack.c.h.b16 %v726
    %v1322 = vunpack.c.l.b16 %v727
    %v1323 = vunpack.c.h.b16 %v727
    %v1324 = vunpack.c.l.b16 %v728
    %v1325 = vunpack.c.h.b16 %v728
    %v1326 = vunpack.c.l.b16 %v729
    %v1327 = vunpack.c.h.b16 %v729
    %v1328 = vunpack.c.l.b16 %v730
    %v1329 = vunpack.c.h.b16 %v730
    %v1330 = vunpack.c.l.b16 %v731
    %v1331 = vunpack.c.h.b16 %v731
    %v1332 = vunpack.c.l.b16 %v732
    %v1333 = vunpack.c.h.b16 %v732
    %v1334 = vunpack.c.l.b16 %v733
    %v1335 = vunpack.c.h.b16 %v733
    %v1336 = vunpack.c.l.b16 %v734
    %v1337 = vunpack.c.h.b16 %v734
    %v1338 = vunpack.c.l.b16 %v735
    %v1339 = vunpack.c.h.b16 %v735
    %v1340 = vunpack.c.l.b16 %v736
    %v1341 = vunpack.c.h.b16 %v736
    %v1342 = vunpack.c.l.b16 %v737
    %v1343 = vunpack.c.h.b16 %v737
    %v1344 = vunpack.c.l.b16 %v738
    %v1345 = vunpack.c.h.b16 %v738
    %v1346 = vunpack.c.l.b16 %v739
    %v1347 = vunpack.c.h.b16 %v739
    %v1348 = vpack.c.b16 %v970, %v964
    %v1349 = vpack.c.b16 %v971, %v965
    %v1350 = vpack.c.b16 %v972, %v966
    %v1351 = vpack.c.b16 %v973, %v967
    %v1352 = vpack.c.b16 %v974, %v968
    %v1353 = vpack.c.b16 %v975, %v969
    %v1354 = vpack.c.b16 %v982, %v976
    %v1355 = vpack.c.b16 %v983, %v977
    %v1356 = vpack.c.b16 %v984, %v978
    %v1357 = vpack.c.b16 %v985, %v979
    %v1358 = vpack.c.b16 %v986, %v980
    %v1359 = vpack.c.b16 %v987, %v981
    %v1360 = vpack.c.b16 %v994, %v988
    %v1361 = vpack.c.b16 %v995, %v989
    %v1362 = vpack.c.b16 %v996, %v990
    %v1363 = vpack.c.b16 %v997, %v991
    %v1364 = vpack.c.b16 %v998, %v992
    %v1365 = vpack.c.b16 %v999, %v993
    %v1366 = vpack.c.b16 %v1006, %v1000
    %v1367 = vpack.c.b16 %v1007, %v1001
    %v1368 = vpack.c.b16 %v1008, %v1002
    %v1369 = vpack.c.b16 %v1009, %v1003
    %v1370 = vpack.c.b16 %v1010, %v1004
    %v1371 = vpack.c.b16 %v1011, %v1005
    %v1372 = vpack.c.b16 %v1018, %v1012
    %v1373 = vpack.c.b16 %v1019, %v1013
    %v1374 = vpack.c.b16 %v1020, %v1014
    %v1375 = vpack.c.b16 %v1021, %v1015
    %v1376 = vpack.c.b16 %v1022, %v1016
    %v1377 = vpack.c.b16 %v1023, %v1017
    %v1378 = vpack.c.b16 %v1030, %v1024
    %v1379 = vpack.c.b16 %v1031, %v1025
    %v1380 = vpack.c.b16 %v1032, %v1026
    %v1381 = vpack.c.b16 %v1033, %v1027
    %v1382 = vpack.c.b16 %v1034, %v1028
    %v1383 = vpack.c.b16 %v1035, %v1029
    %v1384 = vpack.c.b16 %v1042, %v1036
    %v1385 = vpack.c.b16 %v1043, %v1037
    %v1386 = vpack.c.b16 %v1044, %v1038
    %v1387 = vpack.c.b16 %v1045, %v1039
    %v1388 = vpack.c.b16 %v1046, %v1040
    %v1389 = vpack.c.b16 %v1047, %v1041
    %v1390 = vpack.c.b16 %v1054, %v1048
    %v1391 = vpack.c.b16 %v1055, %v1049
    %v1392 = vpack.c.b16 %v1056, %v1050
    %v1393 = vpack.c.b16 %v1057, %v1051
    %v1394 = vpack.c.b16 %v1058, %v1052
    %v1395 = vpack.c.b16 %v1059, %v1053
    %v1396 = vpack.c.b16 %v1066, %v1060
    %v1397 = vpack.c.b16 %v1067, %v1061
    %v1398 = vpack.c.b16 %v1068, %v1062
    %v1399 = vpack.c.b16 %v1069, %v1063
    %v1400 = vpack.c.b16 %v1070, %v1064
    %v1401 = vpack.c.b16 %v1071, %v1065
    %v1402 = vpack.c.b16 %v1078, %v1072
    %v1403 = vpack.c.b16 %v1079, %v1073
    %v1404 = vpack.c.b16 %v1080, %v1074
    %v1405 = vpack.c.b16 %v1081, %v1075
    %v1406 = vpack.c.b16 %v1082, %v1076
    %v1407 = vpack.c.b16 %v1083, %v1077
    %v1408 = vpack.c.b16 %v1090, %v1084
    %v1409 = vpack.c.b16 %v1091, %v1085
    %v1410 = vpack.c.b16 %v1092, %v1086
    %v1411 = vpack.c.b16 %v1093, %v1087
    %v1412 = vpack.c.b16 %v1094, %v1088
    %v1413 = vpack.c.b16 %v1095, %v1089
    %v1414 = vpack.c.b16 %v1102, %v1096
    %v1415 = vpack.c.b16 %v1103, %v1097
    %v1416 = vpack.c.b16 %v1104, %v1098
    %v1417 = vpack.c.b16 %v1105, %v1099
    %v1418 = vpack.c.b16 %v1106, %v1100
    %v1419 = vpack.c.b16 %v1107, %v1101
    %v1420 = vpack.c.b16 %v1114, %v1108
    %v1421 = vpack.c.b16 %v1115, %v1109
    %v1422 = vpack.c.b16 %v1116, %v1110
    %v1423 = vpack.c.b16 %v1117, %v1111
    %v1424 = vpack.c.b16 %v1118, %v1112
    %v1425 = vpack.c.b16 %v1119, %v1113
    %v1426 = vpack.c.b16 %v1126, %v1120
    %v1427 = vpack.c.b16 %v1127, %v1121
    %v1428 = vpack.c.b16 %v1128, %v1122
    %v1429 = vpack.c.b16 %v1129, %v1123
    %v1430 = vpack.c.b16 %v1130, %v1124
    %v1431 = vpack.c.b16 %v1131, %v1125
    %v1432 = vpack.c.b16 %v1138, %v1132
    %v1433 = vpack.c.b16 %v1139, %v1133
    %v1434 = vpack.c.b16 %v1140, %v1134
    %v1435 = vpack.c.b16 %v1141, %v1135
    %v1436 = vpack.c.b16 %v1142, %v1136
    %v1437 = vpack.c.b16 %v1143, %v1137
    %v1438 = vpack.c.b16 %v1150, %v1144
    %v1439 = vpack.c.b16 %v1151, %v1145
    %v1440 = vpack.c.b16 %v1152, %v1146
    %v1441 = vpack.c.b16 %v1153, %v1147
    %v1442 = vpack.c.b16 %v1154, %v1148
    %v1443 = vpack.c.b16 %v1155, %v1149
    %v1444 = vpack.c.b16 %v1162, %v1156
    %v1445 = vpack.c.b16 %v1163, %v1157
    %v1446 = vpack.c.b16 %v1164, %v1158
    %v1447 = vpack.c.b16 %v1165, %v1159
    %v1448 = vpack.c.b16 %v1166, %v1160
    %v1449 = vpack.c.b16 %v1167, %v1161
    %v1450 = vpack.c.b16 %v1174, %v1168
    %v1451 = vpack.c.b16 %v1175, %v1169
    %v1452 = vpack.c.b16 %v1176, %v1170
    %v1453 = vpack.c.b16 %v1177, %v1171
    %v1454 = vpack.c.b16 %v1178, %v1172
    %v1455 = vpack.c.b16 %v1179, %v1173
    %v1456 = vpack.c.b16 %v1186, %v1180
    %v1457 = vpack.c.b16 %v1187, %v1181
    %v1458 = vpack.c.b16 %v1188, %v1182
    %v1459 = vpack.c.b16 %v1189, %v1183
    %v1460 = vpack.c.b16 %v1190, %v1184
    %v1461 = vpack.c.b16 %v1191, %v1185
    %v1462 = vpack.c.b16 %v1198, %v1192
    %v1463 = vpack.c.b16 %v1199, %v1193
    %v1464 = vpack.c.b16 %v1200, %v1194
    %v1465 = vpack.c.b16 %v1201, %v1195
    %v1466 = vpack.c.b16 %v1202, %v1196
    %v1467 = vpack.c.b16 %v1203, %v1197
    %v1468 = vpack.c.b16 %v1210, %v1204
    %v1469 = vpack.c.b16 %v1211, %v1205
    %v1470 = vpack.c.b16 %v1212, %v1206
    %v1471 = vpack.c.b16 %v1213, %v1207
    %v1472 = vpack.c.b16 %v1214, %v1208
    %v1473 = vpack.c.b16 %v1215, %v1209
    %v1474 = vpack.c.b16 %v1222, %v1216
    %v1475 = vpack.c.b16 %v1223, %v1217
    %v1476 = vpack.c.b16 %v1224, %v1218
    %v1477 = vpack.c.b16 %v1225, %v1219
    %v1478 = vpack.c.b16 %v1226, %v1220
    %v1479 = vpack.c.b16 %v1227, %v1221
    %v1480 = vpack.c.b16 %v1234, %v1228
    %v1481 = vpack.c.b16 %v1235, %v1229
    %v1482 = vpack.c.b16 %v1236, %v1230
    %v1483 = vpack.c.b16 %v1237, %v1231
    %v1484 = vpack.c.b16 %v1238, %v1232
    %v1485 = vpack.c.b16 %v1239, %v1233
    %v1486 = vpack.c.b16 %v1246, %v1240
    %v1487 = vpack.c.b16 %v1247, %v1241
    %v1488 = vpack.c.b16 %v1248, %v1242
    %v1489 = vpack.c.b16 %v1249, %v1243
    %v1490 = vpack.c.b16 %v1250, %v1244
    %v1491 = vpack.c.b16 %v1251, %v1245
    %v1492 = vpack.c.b16 %v1258, %v1252
    %v1493 = vpack.c.b16 %v1259, %v1253
    %v1494 = vpack.c.b16 %v1260, %v1254
    %v1495 = vpack.c.b16 %v1261, %v1255
    %v1496 = vpack.c.b16 %v1262, %v1256
    %v1497 = vpack.c.b16 %v1263, %v1257
    %v1498 = vpack.c.b16 %v1270, %v1264
    %v1499 = vpack.c.b16 %v1271, %v1265
    %v1500 = vpack.c.b16 %v1272, %v1266
    %v1501 = vpack.c.b16 %v1273, %v1267
    %v1502 = vpack.c.b16 %v1274, %v1268
    %v1503 = vpack.c.b16 %v1275, %v1269
    %v1504 = vpack.c.b16 %v1282, %v1276
    %v1505 = vpack.c.b16 %v1283, %v1277
    %v1506 = vpack.c.b16 %v1284, %v1278
    %v1507 = vpack.c.b16 %v1285, %v1279
    %v1508 = vpack.c.b16 %v1286, %v1280
    %v1509 = vpack.c.b16 %v1287, %v1281
    %v1510 = vpack.c.b16 %v1294, %v1288
    %v1511 = vpack.c.b16 %v1295, %v1289
    %v1512 = vpack.c.b16 %v1296, %v1290
    %v1513 = vpack.c.b16 %v1297, %v1291
    %v1514 = vpack.c.b16 %v1298, %v1292
    %v1515 = vpack.c.b16 %v1299, %v1293
    %v1516 = vpack.c.b16 %v1306, %v1300
    %v1517 = vpack.c.b16 %v1307, %v1301
    %v1518 = vpack.c.b16 %v1308, %v1302
    %v1519 = vpack.c.b16 %v1309, %v1303
    %v1520 = vpack.c.b16 %v1310, %v1304
    %v1521 = vpack.c.b16 %v1311, %v1305
    %v1522 = vpack.c.b16 %v1318, %v1312
    %v1523 = vpack.c.b16 %v1319, %v1313
    %v1524 = vpack.c.b16 %v1320, %v1314
    %v1525 = vpack.c.b16 %v1321, %v1315
    %v1526 = vpack.c.b16 %v1322, %v1316
    %v1527 = vpack.c.b16 %v1323, %v1317
    %v1528 = vpack.c.b16 %v1330, %v1324
    %v1529 = vpack.c.b16 %v1331, %v1325
    %v1530 = vpack.c.b16 %v1332, %v1326
    %v1531 = vpack.c.b16 %v1333, %v1327
    %v1532 = vpack.c.b16 %v1334, %v1328
    %v1533 = vpack.c.b16 %v1335, %v1329
    %v1534 = vpack.c.b16 %v1342, %v1336
    %v1535 = vpack.c.b16 %v1343, %v1337
    %v1536 = vpack.c.b16 %v1344, %v1338
    %v1537 = vpack.c.b16 %v1345, %v1339
    %v1538 = vpack.c.b16 %v1346, %v1340
    %v1539 = vpack.c.b16 %v1347, %v1341
    %1732 = vmatprep.subr.bf16.mxu0 %v1349
    %1733 = vmatpush1.bf16.msra.mxu0 %v1348
    %1734 = vmatprep.subr.bf16.mxu0 %v1355
    %1735 = vmatpush1.bf16.msra.mxu0 %v1354
    %1736 = vmatprep.subr.bf16.mxu0 %v1361
    %1737 = vmatpush1.bf16.msra.mxu0 %v1360
    %1738 = vmatprep.subr.bf16.mxu0 %v1367
    %1739 = vmatpush1.bf16.msra.mxu0 %v1366
    %1740 = vmatprep.subr.bf16.mxu0 %v1373
    %1741 = vmatpush1.bf16.msra.mxu0 %v1372
    %1742 = vmatprep.subr.bf16.mxu0 %v1379
    %1743 = vmatpush1.bf16.msra.mxu0 %v1378
    %1744 = vmatprep.subr.bf16.mxu0 %v1385
    %1745 = vmatpush1.bf16.msra.mxu0 %v1384
    %1746 = vmatprep.subr.bf16.mxu0 %v1391
    %1747 = vmatpush1.bf16.msra.mxu0 %v1390
    %1748 = vmatprep.subr.bf16.mxu0 %v1397
    %1749 = vmatpush1.bf16.msra.mxu0 %v1396
    %1750 = vmatprep.subr.bf16.mxu0 %v1403
    %1751 = vmatpush1.bf16.msra.mxu0 %v1402
    %1752 = vmatprep.subr.bf16.mxu0 %v1409
    %1753 = vmatpush1.bf16.msra.mxu0 %v1408
    %1754 = vmatprep.subr.bf16.mxu0 %v1415
    %1755 = vmatpush1.bf16.msra.mxu0 %v1414
    %1756 = vmatprep.subr.bf16.mxu0 %v1421
    %1757 = vmatpush1.bf16.msra.mxu0 %v1420
    %1758 = vmatprep.subr.bf16.mxu0 %v1427
    %1759 = vmatpush1.bf16.msra.mxu0 %v1426
    %1760 = vmatprep.subr.bf16.mxu0 %v1433
    %1761 = vmatpush1.bf16.msra.mxu0 %v1432
    %1762 = vmatprep.subr.bf16.mxu0 %v1439
    %1763 = vmatpush1.bf16.msra.mxu0 %v1438
    %1764 = vmatprep.mubr.bf16.mxu0 %v545
    %1765 = vmatmul.mubr.bf16.gmra.mrb[0].mxu0 %v544
    %v1766 = vpop.f32.mrb[0].mxu0
    %v1767 = vadd.f32 %v745, %v1766
    %v1768 = vpop.f32.mrb[0].mxu0
    %v1769 = vadd.f32 %v749, %v1768
    %v1770 = vpop.f32.mrb[0].mxu0
    %v1771 = vpop.f32.mrb[0].mxu0
    %1772 = vdwg.mxu0
    %1773 = vmatprep.subr.bf16.mxu0 %v1445
    %1774 = vmatpush1.bf16.msra.mxu0 %v1444
    %1775 = vmatprep.subr.bf16.mxu0 %v1451
    %1776 = vmatpush1.bf16.msra.mxu0 %v1450
    %1777 = vmatprep.subr.bf16.mxu0 %v1457
    %1778 = vmatpush1.bf16.msra.mxu0 %v1456
    %1779 = vmatprep.subr.bf16.mxu0 %v1463
    %1780 = vmatpush1.bf16.msra.mxu0 %v1462
    %1781 = vmatprep.subr.bf16.mxu0 %v1469
    %1782 = vmatpush1.bf16.msra.mxu0 %v1468
    %1783 = vmatprep.subr.bf16.mxu0 %v1475
    %1784 = vmatpush1.bf16.msra.mxu0 %v1474
    %1785 = vmatprep.subr.bf16.mxu0 %v1481
    %1786 = vmatpush1.bf16.msra.mxu0 %v1480
    %1787 = vmatprep.subr.bf16.mxu0 %v1487
    %1788 = vmatpush1.bf16.msra.mxu0 %v1486
    %1789 = vmatprep.subr.bf16.mxu0 %v1493
    %1790 = vmatpush1.bf16.msra.mxu0 %v1492
    %1791 = vmatprep.subr.bf16.mxu0 %v1499
    %1792 = vmatpush1.bf16.msra.mxu0 %v1498
    %1793 = vmatprep.subr.bf16.mxu0 %v1505
    %1794 = vmatpush1.bf16.msra.mxu0 %v1504
    %1795 = vmatprep.subr.bf16.mxu0 %v1511
    %1796 = vmatpush1.bf16.msra.mxu0 %v1510
    %1797 = vmatprep.subr.bf16.mxu0 %v1517
    %1798 = vmatpush1.bf16.msra.mxu0 %v1516
    %1799 = vmatprep.subr.bf16.mxu0 %v1523
    %1800 = vmatpush1.bf16.msra.mxu0 %v1522
    %1801 = vmatprep.subr.bf16.mxu0 %v1529
    %1802 = vmatpush1.bf16.msra.mxu0 %v1528
    %1803 = vmatprep.subr.bf16.mxu0 %v1535
    %1804 = vmatpush1.bf16.msra.mxu0 %v1534
    %1805 = vmatprep.mubr.bf16.mxu0 %v547
    %1806 = vmatmul.mubr.bf16.gmra.mrb[0].mxu0 %v546
    %v1807 = vpop.f32.mrb[0].mxu0
    %v1808 = vadd.f32 %v1767, %v1807
    %v1809 = vpop.f32.mrb[0].mxu0
    %v1810 = vadd.f32 %v1769, %v1809
    %v1811 = vpop.f32.mrb[0].mxu0
    %v1812 = vpop.f32.mrb[0].mxu0
    %1813 = vdwg.mxu0
    %1814 = vmatprep.subr.bf16.mxu0 %v1351
    %1815 = vmatpush1.bf16.msra.mxu0 %v1350
    %1816 = vmatprep.subr.bf16.mxu0 %v1357
    %1817 = vmatpush1.bf16.msra.mxu0 %v1356
    %1818 = vmatprep.subr.bf16.mxu0 %v1363
    %1819 = vmatpush1.bf16.msra.mxu0 %v1362
    %1820 = vmatprep.subr.bf16.mxu0 %v1369
    %1821 = vmatpush1.bf16.msra.mxu0 %v1368
    %1822 = vmatprep.subr.bf16.mxu0 %v1375
    %1823 = vmatpush1.bf16.msra.mxu0 %v1374
    %1824 = vmatprep.subr.bf16.mxu0 %v1381
    %1825 = vmatpush1.bf16.msra.mxu0 %v1380
    %1826 = vmatprep.subr.bf16.mxu0 %v1387
    %1827 = vmatpush1.bf16.msra.mxu0 %v1386
    %1828 = vmatprep.subr.bf16.mxu0 %v1393
    %1829 = vmatpush1.bf16.msra.mxu0 %v1392
    %1830 = vmatprep.subr.bf16.mxu0 %v1399
    %1831 = vmatpush1.bf16.msra.mxu0 %v1398
    %1832 = vmatprep.subr.bf16.mxu0 %v1405
    %1833 = vmatpush1.bf16.msra.mxu0 %v1404
    %1834 = vmatprep.subr.bf16.mxu0 %v1411
    %1835 = vmatpush1.bf16.msra.mxu0 %v1410
    %1836 = vmatprep.subr.bf16.mxu0 %v1417
    %1837 = vmatpush1.bf16.msra.mxu0 %v1416
    %1838 = vmatprep.subr.bf16.mxu0 %v1423
    %1839 = vmatpush1.bf16.msra.mxu0 %v1422
    %1840 = vmatprep.subr.bf16.mxu0 %v1429
    %1841 = vmatpush1.bf16.msra.mxu0 %v1428
    %1842 = vmatprep.subr.bf16.mxu0 %v1435
    %1843 = vmatpush1.bf16.msra.mxu0 %v1434
    %1844 = vmatprep.subr.bf16.mxu0 %v1441
    %1845 = vmatpush1.bf16.msra.mxu0 %v1440
    %1846 = vmatprep.mubr.bf16.mxu0 %v545
    %1847 = vmatmul.mubr.bf16.gmra.mrb[0].mxu0 %v544
    %v1848 = vpop.f32.mrb[0].mxu0
    %v1849 = vadd.f32 %v753, %v1848
    %v1850 = vpop.f32.mrb[0].mxu0
    %v1851 = vadd.f32 %v757, %v1850
    %v1852 = vpop.f32.mrb[0].mxu0
    %v1853 = vpop.f32.mrb[0].mxu0
    %1854 = vdwg.mxu0
    %1855 = vmatprep.subr.bf16.mxu0 %v1447
    %1856 = vmatpush1.bf16.msra.mxu0 %v1446
    %1857 = vmatprep.subr.bf16.mxu0 %v1453
    %1858 = vmatpush1.bf16.msra.mxu0 %v1452
    %1859 = vmatprep.subr.bf16.mxu0 %v1459
    %1860 = vmatpush1.bf16.msra.mxu0 %v1458
    %1861 = vmatprep.subr.bf16.mxu0 %v1465
    %1862 = vmatpush1.bf16.msra.mxu0 %v1464
    %1863 = vmatprep.subr.bf16.mxu0 %v1471
    %1864 = vmatpush1.bf16.msra.mxu0 %v1470
    %1865 = vmatprep.subr.bf16.mxu0 %v1477
    %1866 = vmatpush1.bf16.msra.mxu0 %v1476
    %1867 = vmatprep.subr.bf16.mxu0 %v1483
    %1868 = vmatpush1.bf16.msra.mxu0 %v1482
    %1869 = vmatprep.subr.bf16.mxu0 %v1489
    %1870 = vmatpush1.bf16.msra.mxu0 %v1488
    %1871 = vmatprep.subr.bf16.mxu0 %v1495
    %1872 = vmatpush1.bf16.msra.mxu0 %v1494
    %1873 = vmatprep.subr.bf16.mxu0 %v1501
    %1874 = vmatpush1.bf16.msra.mxu0 %v1500
    %1875 = vmatprep.subr.bf16.mxu0 %v1507
    %1876 = vmatpush1.bf16.msra.mxu0 %v1506
    %1877 = vmatprep.subr.bf16.mxu0 %v1513
    %1878 = vmatpush1.bf16.msra.mxu0 %v1512
    %1879 = vmatprep.subr.bf16.mxu0 %v1519
    %1880 = vmatpush1.bf16.msra.mxu0 %v1518
    %1881 = vmatprep.subr.bf16.mxu0 %v1525
    %1882 = vmatpush1.bf16.msra.mxu0 %v1524
    %1883 = vmatprep.subr.bf16.mxu0 %v1531
    %1884 = vmatpush1.bf16.msra.mxu0 %v1530
    %1885 = vmatprep.subr.bf16.mxu0 %v1537
    %1886 = vmatpush1.bf16.msra.mxu0 %v1536
    %1887 = vmatprep.mubr.bf16.mxu0 %v547
    %1888 = vmatmul.mubr.bf16.gmra.mrb[0].mxu0 %v546
    %v1889 = vpop.f32.mrb[0].mxu0
    %v1890 = vadd.f32 %v1849, %v1889
    %v1891 = vpop.f32.mrb[0].mxu0
    %v1892 = vadd.f32 %v1851, %v1891
    %v1893 = vpop.f32.mrb[0].mxu0
    %v1894 = vpop.f32.mrb[0].mxu0
    %1895 = vdwg.mxu0
    %1896 = vmatprep.subr.bf16.mxu0 %v1353
    %1897 = vmatpush1.bf16.msra.mxu0 %v1352
    %1898 = vmatprep.subr.bf16.mxu0 %v1359
    %1899 = vmatpush1.bf16.msra.mxu0 %v1358
    %1900 = vmatprep.subr.bf16.mxu0 %v1365
    %1901 = vmatpush1.bf16.msra.mxu0 %v1364
    %1902 = vmatprep.subr.bf16.mxu0 %v1371
    %1903 = vmatpush1.bf16.msra.mxu0 %v1370
    %1904 = vmatprep.subr.bf16.mxu0 %v1377
    %1905 = vmatpush1.bf16.msra.mxu0 %v1376
    %1906 = vmatprep.subr.bf16.mxu0 %v1383
    %1907 = vmatpush1.bf16.msra.mxu0 %v1382
    %1908 = vmatprep.subr.bf16.mxu0 %v1389
    %1909 = vmatpush1.bf16.msra.mxu0 %v1388
    %1910 = vmatprep.subr.bf16.mxu0 %v1395
    %1911 = vmatpush1.bf16.msra.mxu0 %v1394
    %1912 = vmatprep.subr.bf16.mxu0 %v1401
    %1913 = vmatpush1.bf16.msra.mxu0 %v1400
    %1914 = vmatprep.subr.bf16.mxu0 %v1407
    %1915 = vmatpush1.bf16.msra.mxu0 %v1406
    %1916 = vmatprep.subr.bf16.mxu0 %v1413
    %1917 = vmatpush1.bf16.msra.mxu0 %v1412
    %1918 = vmatprep.subr.bf16.mxu0 %v1419
    %1919 = vmatpush1.bf16.msra.mxu0 %v1418
    %1920 = vmatprep.subr.bf16.mxu0 %v1425
    %1921 = vmatpush1.bf16.msra.mxu0 %v1424
    %1922 = vmatprep.subr.bf16.mxu0 %v1431
    %1923 = vmatpush1.bf16.msra.mxu0 %v1430
    %1924 = vmatprep.subr.bf16.mxu0 %v1437
    %1925 = vmatpush1.bf16.msra.mxu0 %v1436
    %1926 = vmatprep.subr.bf16.mxu0 %v1443
    %1927 = vmatpush1.bf16.msra.mxu0 %v1442
    %1928 = vmatprep.mubr.bf16.mxu0 %v545
    %1929 = vmatmul.mubr.bf16.gmra.mrb[0].mxu0 %v544
    %v1930 = vpop.f32.mrb[0].mxu0
    %v1931 = vadd.f32 %v761, %v1930
    %v1932 = vpop.f32.mrb[0].mxu0
    %v1933 = vadd.f32 %v765, %v1932
    %v1934 = vpop.f32.mrb[0].mxu0
    %v1935 = vpop.f32.mrb[0].mxu0
    %1936 = vdwg.mxu0
    %1937 = vmatprep.subr.bf16.mxu0 %v1449
    %1938 = vmatpush1.bf16.msra.mxu0 %v1448
    %1939 = vmatprep.subr.bf16.mxu0 %v1455
    %1940 = vmatpush1.bf16.msra.mxu0 %v1454
    %1941 = vmatprep.subr.bf16.mxu0 %v1461
    %1942 = vmatpush1.bf16.msra.mxu0 %v1460
    %1943 = vmatprep.subr.bf16.mxu0 %v1467
    %1944 = vmatpush1.bf16.msra.mxu0 %v1466
    %1945 = vmatprep.subr.bf16.mxu0 %v1473
    %1946 = vmatpush1.bf16.msra.mxu0 %v1472
    %1947 = vmatprep.subr.bf16.mxu0 %v1479
    %1948 = vmatpush1.bf16.msra.mxu0 %v1478
    %1949 = vmatprep.subr.bf16.mxu0 %v1485
    %1950 = vmatpush1.bf16.msra.mxu0 %v1484
    %1951 = vmatprep.subr.bf16.mxu0 %v1491
    %1952 = vmatpush1.bf16.msra.mxu0 %v1490
    %1953 = vmatprep.subr.bf16.mxu0 %v1497
    %1954 = vmatpush1.bf16.msra.mxu0 %v1496
    %1955 = vmatprep.subr.bf16.mxu0 %v1503
    %1956 = vmatpush1.bf16.msra.mxu0 %v1502
    %1957 = vmatprep.subr.bf16.mxu0 %v1509
    %1958 = vmatpush1.bf16.msra.mxu0 %v1508
    %1959 = vmatprep.subr.bf16.mxu0 %v1515
    %1960 = vmatpush1.bf16.msra.mxu0 %v1514
    %1961 = vmatprep.subr.bf16.mxu0 %v1521
    %1962 = vmatpush1.bf16.msra.mxu0 %v1520
    %1963 = vmatprep.subr.bf16.mxu0 %v1527
    %1964 = vmatpush1.bf16.msra.mxu0 %v1526
    %1965 = vmatprep.subr.bf16.mxu0 %v1533
    %1966 = vmatpush1.bf16.msra.mxu0 %v1532
    %1967 = vmatprep.subr.bf16.mxu0 %v1539
    %1968 = vmatpush1.bf16.msra.mxu0 %v1538
    %1969 = vmatprep.mubr.bf16.mxu0 %v547
    %1970 = vmatmul.mubr.bf16.gmra.mrb[0].mxu0 %v546
    %v1971 = vpop.f32.mrb[0].mxu0
    %v1972 = vadd.f32 %v1931, %v1971
    %v1973 = vpop.f32.mrb[0].mxu0
    %v1974 = vadd.f32 %v1933, %v1973
    %v1975 = vpop.f32.mrb[0].mxu0
    %v1976 = vpop.f32.mrb[0].mxu0
    %1977 = vdwg.mxu0
    %v1978 = vtanh.pop %v1808
    %v1979 = vtanh.pop %v1810
    %v1980 = vtanh.pop %v1890
    %v1981 = vtanh.pop %v1892
    %v1982 = vtanh.pop %v1972
    %v1983 = vtanh.pop %v1974
    %1984 = vst [vmem:[%s5] sm:$0xff] %v1978
    %1985 = vst [vmem:[%s5 + $0x8] sm:$0xff] %v1979
    %1986 = vst [vmem:[%s5 + $0x10] sm:$0xff] %v1980
    %1987 = vst [vmem:[%s5 + $0x18] sm:$0xff] %v1981
    %1988 = vst [vmem:[%s5 + $0x20] sm:$0xff] %v1982
    %1989 = vst [vmem:[%s5 + $0x28] sm:$0xff] %v1983
    // Predicated region
    $region30: #{decoder_forward.1} parent=1 // pred_check
      _
    $region31: #{decoder_forward.1} parent=1 // pred_check_branch
      %1991 = sbr.rel (0) target = $region33
    $region32: #{decoder_forward.1} parent=1 // pred_region
      _
    $region33: #{decoder_forward.1} parent=1 // pred_fallthru
      _
    // Predicated region
    $region34: #{decoder_forward.1} parent=1 // pred_check
      _
    $region35: #{decoder_forward.1} parent=1 // pred_check_branch
      %1993 = sbr.rel (0) target = $region37
    $region36: #{decoder_forward.1} parent=1 // pred_region
      _
    $region37: #{decoder_forward.1} parent=1 // pred_fallthru
      _
    %1994 = vsyncpa [#allocation3], 1
    %1995 = vsyncpa [#allocation5], 1

</llo_original>
